<compile_context>
chip_gen: v5e
topology: v5e:2x2
jax: 0.10.0
libtpu: 0.0.40
codegen_flags: <defaults>
</compile_context>

<pallas_src>
import functools
import math

import jax
import jax.numpy as jnp
from jax import lax
from jax.experimental import pallas as pl
from jax.experimental.pallas import tpu as pltpu


# -----------------------------------------------------------------------------
# Kernel: one batch tile (B_TILE sequence rows worth of batch elements) per step.
#   q_ref: (B_TILE*L, E)   k_ref, v_ref: (B_TILE*S, E)
#   ln_ref: (2, 1, E)  [gamma, beta]
#   w_in_ref: (3, E, E)  [Wq^T, Wk^T, Wv^T]     b_in_ref: (3, 1, E)
#   wo_ref: (H, hd, E)   [per-head row-slabs of Wo^T]   bo_ref: (1, E)
#   o_ref: (B_TILE*L, E)
# -----------------------------------------------------------------------------
def _xattn_kernel(q_ref, k_ref, v_ref, ln_ref, w_in_ref, b_in_ref, wo_ref,
                  bo_ref, o_ref, *, n_head, b_tile, q_len, kv_len):
    E = q_ref.shape[-1]
    hd = E // n_head
    scale = 1.0 / math.sqrt(hd)
    cdtype = q_ref.dtype  # MXU operand dtype follows the model dtype.

    gamma = ln_ref[0].astype(jnp.float32)   # (1, E)
    beta = ln_ref[1].astype(jnp.float32)    # (1, E)

    def layernorm(x):                       # x: (rows, E); fp32 stats (PyTorch LN)
        xf = x.astype(jnp.float32)
        mu = jnp.mean(xf, axis=-1, keepdims=True)
        var = jnp.mean(jnp.square(xf - mu), axis=-1, keepdims=True)
        y = (xf - mu) * lax.rsqrt(var + 1e-5)
        return (y * gamma + beta).astype(cdtype)

    # LN + input projections, fused over the whole batch tile (big 2D matmuls).
    qn = layernorm(q_ref[...])              # (B*L, E)
    kn = layernorm(k_ref[...])              # (B*S, E)
    vn = layernorm(v_ref[...])              # (B*S, E)

    def proj(x, j, post_scale=None):
        y = jnp.dot(x, w_in_ref[j].astype(cdtype),
                    preferred_element_type=jnp.float32)
        y = y + b_in_ref[j].astype(jnp.float32)
        if post_scale is not None:
            y = y * post_scale               # fold 1/sqrt(hd) once, in f32
        return y.astype(cdtype)

    q = proj(qn, 0, post_scale=scale)       # (B*L, E), already scaled
    k = proj(kn, 1)                         # (B*S, E)
    v = proj(vn, 2)                         # (B*S, E)

    bo = bo_ref[...].astype(jnp.float32)    # (1, E)
    nt = (((1,), (1,)), ((), ()))           # contract last axes (no .T)

    # Per batch-element, per-head attention; output projection folded into the
    # head loop as a sum over per-head Wo^T slabs (no lane concatenate).
    for b in range(b_tile):
        qb = q[b * q_len:(b + 1) * q_len, :]        # (L, E)
        kb = k[b * kv_len:(b + 1) * kv_len, :]      # (S, E)
        vb = v[b * kv_len:(b + 1) * kv_len, :]      # (S, E)
        out_acc = jnp.broadcast_to(bo, (q_len, E))  # start from output bias
        for h in range(n_head):
            lo = h * hd
            qh = qb[:, lo:lo + hd]
            kh = kb[:, lo:lo + hd]
            vh = vb[:, lo:lo + hd]
            logits = lax.dot_general(
                qh, kh, nt, preferred_element_type=jnp.float32)          # (L, S)
            m = jnp.max(logits, axis=-1, keepdims=True)
            p = jnp.exp(logits - m)                                      # f32
            inv_l = pl.reciprocal(jnp.sum(p, axis=-1, keepdims=True),
                                  approx=True)                           # (L, 1)
            ctx = jnp.dot(p.astype(cdtype), vh,
                          preferred_element_type=jnp.float32) * inv_l    # (L, hd)
            out_acc = out_acc + jnp.dot(ctx.astype(cdtype),
                                        wo_ref[h].astype(cdtype),
                                        preferred_element_type=jnp.float32)
        o_ref[b * q_len:(b + 1) * q_len, :] = out_acc.astype(o_ref.dtype)


# -----------------------------------------------------------------------------
# Batch-tile selection: largest divisor of N whose row blocks are layout-legal
# and whose unroll / double-buffered VMEM footprint is bounded.
# -----------------------------------------------------------------------------
def _pick_b_tile(n_batch, q_len, kv_len, d_model, n_head, itemsize):
    per_elem = (2 * q_len + 2 * kv_len) * d_model * itemsize * 2  # q,k,v,out (dbl-buf)
    vmem_budget = 8 * 1024 * 1024
    cap = min(n_batch,
              max(1, vmem_budget // max(per_elem, 1)),
              max(1, 64 // max(n_head, 1)))
    best = None
    for d in range(1, n_batch + 1):
        if n_batch % d:
            continue
        legal = (d == n_batch) or ((d * q_len) % 8 == 0 and (d * kv_len) % 8 == 0)
        if legal and d <= cap:
            best = d
    # Full-batch blocks are always layout-legal (block == full array dims).
    return best if best is not None else n_batch


# -----------------------------------------------------------------------------
# Wrapper: PyTorch (L, N, E) convention in / out.
# -----------------------------------------------------------------------------
def cross_attention_block(query, key, value, params, n_head: int):
    L, N, E = query.shape
    S = key.shape[0]
    assert E % n_head == 0
    hd = E // n_head
    dtype = query.dtype

    # Lane-dense 2D slabs, rows grouped by batch element.
    q2 = jnp.transpose(query, (1, 0, 2)).reshape(N * L, E)
    k2 = jnp.transpose(key, (1, 0, 2)).reshape(N * S, E)
    v2 = jnp.transpose(value, (1, 0, 2)).reshape(N * S, E)

    in_w = params["in_proj_weight"].astype(dtype)          # (3E, E)
    in_b = params["in_proj_bias"].astype(jnp.float32)      # (3E,)
    w_in = jnp.stack([in_w[0 * E:1 * E].T,
                      in_w[1 * E:2 * E].T,
                      in_w[2 * E:3 * E].T], axis=0)        # (3, E, E), y = x @ W
    b_in = in_b.reshape(3, 1, E)                           # (3, 1, E)
    wo = params["out_proj_weight"].astype(dtype).T.reshape(n_head, hd, E)
    bo = params["out_proj_bias"].astype(jnp.float32).reshape(1, E)
    ln = jnp.stack([params["ln_weight"].astype(jnp.float32).reshape(1, E),
                    params["ln_bias"].astype(jnp.float32).reshape(1, E)],
                   axis=0)                                 # (2, 1, E)

    b_tile = _pick_b_tile(N, L, S, E, n_head, jnp.dtype(dtype).itemsize)
    grid = (N // b_tile,)

    kernel = functools.partial(_xattn_kernel, n_head=n_head, b_tile=b_tile,
                               q_len=L, kv_len=S)

    out2 = pl.pallas_call(
        kernel,
        out_shape=jax.ShapeDtypeStruct((N * L, E), dtype),
        grid_spec=pltpu.PrefetchScalarGridSpec(
            num_scalar_prefetch=0,
            grid=grid,
            in_specs=[
                pl.BlockSpec((b_tile * L, E), lambda i: (i, 0)),        # q rows
                pl.BlockSpec((b_tile * S, E), lambda i: (i, 0)),        # k rows
                pl.BlockSpec((b_tile * S, E), lambda i: (i, 0)),        # v rows
                pl.BlockSpec((2, 1, E), lambda i: (0, 0, 0)),           # ln gamma/beta
                pl.BlockSpec((3, E, E), lambda i: (0, 0, 0)),           # Wq/Wk/Wv ^T
                pl.BlockSpec((3, 1, E), lambda i: (0, 0, 0)),           # bq/bk/bv
                pl.BlockSpec((n_head, hd, E), lambda i: (0, 0, 0)),     # Wo^T per head
                pl.BlockSpec((1, E), lambda i: (0, 0)),                 # bo
            ],
            out_specs=pl.BlockSpec((b_tile * L, E), lambda i: (i, 0)),
        ),
        compiler_params=pltpu.CompilerParams(
            dimension_semantics=("parallel",),
            vmem_limit_bytes=64 * 1024 * 1024,
        ),
    )(q2, k2, v2, ln, w_in, b_in, wo, bo)

    return jnp.transpose(out2.reshape(N, L, E), (1, 0, 2))   # back to (L, N, E)
    # TODO(synk): when E < 128 the output store is lane-masked; a lane-dense
    # (B_TILE, L*E) out_spec would need an in-kernel sublane->lane reshape.


# -----------------------------------------------------------------------------
# Pure-JAX reference (same math, no Pallas) for correctness.
# -----------------------------------------------------------------------------
def reference(query, key, value, params, n_head: int):
    E = query.shape[-1]
    hd = E // n_head
    gamma = params["ln_weight"]
    beta = params["ln_bias"]

    def ln(x):
        xf = x.astype(jnp.float32)
        mu = xf.mean(-1, keepdims=True)
        var = ((xf - mu) ** 2).mean(-1, keepdims=True)
        return ((xf - mu) / jnp.sqrt(var + 1e-5)) * gamma + beta

    in_w, in_b = params["in_proj_weight"], params["in_proj_bias"]
    q = ln(query) @ in_w[:E].T + in_b[:E]
    k = ln(key) @ in_w[E:2 * E].T + in_b[E:2 * E]
    v = ln(value) @ in_w[2 * E:].T + in_b[2 * E:]

    L, N, _ = q.shape
    S = k.shape[0]
    qh = q.reshape(L, N, n_head, hd)
    kh = k.reshape(S, N, n_head, hd)
    vh = v.reshape(S, N, n_head, hd)
    logits = jnp.einsum("lnhd,snhd->nhls", qh, kh) / math.sqrt(hd)
    p = jax.nn.softmax(logits, axis=-1)
    ctx = jnp.einsum("nhls,snhd->lnhd", p, vh).reshape(L, N, E)
    return ctx @ params["out_proj_weight"].T + params["out_proj_bias"]


if __name__ == "__main__":
    d_model, n_head = 32, 4
    L, S, N = 8, 8, 2

    key0 = jax.random.PRNGKey(0)
    ks = jax.random.split(key0, 8)

    params = {
        "in_proj_weight": 0.1 * jax.random.normal(ks[0], (3 * d_model, d_model), jnp.float32),
        "in_proj_bias": 0.1 * jax.random.normal(ks[1], (3 * d_model,), jnp.float32),
        "out_proj_weight": 0.1 * jax.random.normal(ks[2], (d_model, d_model), jnp.float32),
        "out_proj_bias": 0.1 * jax.random.normal(ks[3], (d_model,), jnp.float32),
        "ln_weight": jnp.ones((d_model,), jnp.float32)
                     + 0.05 * jax.random.normal(ks[4], (d_model,), jnp.float32),
        "ln_bias": 0.05 * jax.random.normal(ks[5], (d_model,), jnp.float32),
    }

    query = jax.random.normal(ks[6], (L, N, d_model), jnp.float32)
    kv_key = jax.random.split(ks[7], 2)
    key_t = jax.random.normal(kv_key[0], (S, N, d_model), jnp.float32)
    value_t = jax.random.normal(kv_key[1], (S, N, d_model), jnp.float32)

    out = cross_attention_block(query, key_t, value_t, params, n_head)
    out = jax.block_until_ready(out)

    ref = reference(query, key_t, value_t, params, n_head)
    assert out.shape == (L, N, d_model)
    # Tolerance accounts for the EUP approximate-reciprocal softmax denominator.
    assert jnp.allclose(out, ref, atol=1e-3, rtol=1e-3), float(jnp.max(jnp.abs(out - ref)))

    print("KERNEL_OK")
</pallas_src>

<mosaic_0001>
module attributes {stable_mosaic.version = 11 : i64} {
  func.func @_xattn_kernel(%arg0: i32, %arg1: memref<16x32xf32, #tpu.memory_space<vmem>>, %arg2: memref<16x32xf32, #tpu.memory_space<vmem>>, %arg3: memref<16x32xf32, #tpu.memory_space<vmem>>, %arg4: memref<2x1x32xf32, #tpu.memory_space<vmem>>, %arg5: memref<3x32x32xf32, #tpu.memory_space<vmem>>, %arg6: memref<3x1x32xf32, #tpu.memory_space<vmem>>, %arg7: memref<4x8x32xf32, #tpu.memory_space<vmem>>, %arg8: memref<1x32xf32, #tpu.memory_space<vmem>>, %arg9: memref<16x32xf32, #tpu.memory_space<vmem>>) attributes {dimension_semantics = [#tpu.dimension_semantics<parallel>], iteration_bounds = array<i64: 1>, scalar_prefetch = 0 : i64, scratch_operands = 0 : i64, tpu.core_type = #tpu.core_type<tc>, window_params = [{transform_indices = @transform_0, window_bounds = array<i64: 16, 32>}, {transform_indices = @transform_1, window_bounds = array<i64: 16, 32>}, {transform_indices = @transform_2, window_bounds = array<i64: 16, 32>}, {pipeline_mode = #tpu.pipeline_mode<synchronous>, transform_indices = @transform_3, window_bounds = array<i64: 2, 1, 32>}, {pipeline_mode = #tpu.pipeline_mode<synchronous>, transform_indices = @transform_4, window_bounds = array<i64: 3, 32, 32>}, {pipeline_mode = #tpu.pipeline_mode<synchronous>, transform_indices = @transform_5, window_bounds = array<i64: 3, 1, 32>}, {pipeline_mode = #tpu.pipeline_mode<synchronous>, transform_indices = @transform_6, window_bounds = array<i64: 4, 8, 32>}, {pipeline_mode = #tpu.pipeline_mode<synchronous>, transform_indices = @transform_7, window_bounds = array<i64: 1, 32>}, {transform_indices = @transform_8, window_bounds = array<i64: 16, 32>}]} {
    %c0 = arith.constant 0 : index
    %c0_0 = arith.constant 0 : index
    %c0_1 = arith.constant 0 : index
    %0 = vector.load %arg4[%c0, %c0_0, %c0_1] : memref<2x1x32xf32, #tpu.memory_space<vmem>>, vector<1x1x32xf32>
    %1 = vector.shape_cast %0 : vector<1x1x32xf32> to vector<1x32xf32>
    %c1 = arith.constant 1 : index
    %c0_2 = arith.constant 0 : index
    %c0_3 = arith.constant 0 : index
    %2 = vector.load %arg4[%c1, %c0_2, %c0_3] : memref<2x1x32xf32, #tpu.memory_space<vmem>>, vector<1x1x32xf32>
    %3 = vector.shape_cast %2 : vector<1x1x32xf32> to vector<1x32xf32>
    %c0_4 = arith.constant 0 : index
    %c0_5 = arith.constant 0 : index
    %4 = vector.load %arg1[%c0_4, %c0_5] : memref<16x32xf32, #tpu.memory_space<vmem>>, vector<16x32xf32>
    %cst = arith.constant dense<0.000000e+00> : vector<16xf32>
    %5 = vector.multi_reduction <add>, %4, %cst [1] : vector<16x32xf32> to vector<16xf32>
    %6 = vector.shape_cast %5 : vector<16xf32> to vector<16x1xf32>
    %cst_6 = arith.constant 3.200000e+01 : f32
    %7 = vector.broadcast %cst_6 : f32 to vector<16x1xf32>
    %8 = arith.divf %6, %7 : vector<16x1xf32>
    %9 = vector.broadcast %8 : vector<16x1xf32> to vector<16x32xf32>
    %10 = arith.subf %4, %9 : vector<16x32xf32>
    %11 = arith.mulf %10, %10 : vector<16x32xf32>
    %cst_7 = arith.constant dense<0.000000e+00> : vector<16xf32>
    %12 = vector.multi_reduction <add>, %11, %cst_7 [1] : vector<16x32xf32> to vector<16xf32>
    %13 = vector.shape_cast %12 : vector<16xf32> to vector<16x1xf32>
    %cst_8 = arith.constant 3.200000e+01 : f32
    %14 = vector.broadcast %cst_8 : f32 to vector<16x1xf32>
    %15 = arith.divf %13, %14 : vector<16x1xf32>
    %16 = vector.broadcast %8 : vector<16x1xf32> to vector<16x32xf32>
    %17 = arith.subf %4, %16 : vector<16x32xf32>
    %cst_9 = arith.constant 9.99999974E-6 : f32
    %18 = vector.broadcast %cst_9 : f32 to vector<16x1xf32>
    %19 = arith.addf %15, %18 : vector<16x1xf32>
    %20 = math.rsqrt %19 : vector<16x1xf32>
    %21 = vector.broadcast %20 : vector<16x1xf32> to vector<16x32xf32>
    %22 = arith.mulf %17, %21 : vector<16x32xf32>
    %23 = vector.broadcast %1 : vector<1x32xf32> to vector<16x32xf32>
    %24 = arith.mulf %22, %23 : vector<16x32xf32>
    %25 = vector.broadcast %3 : vector<1x32xf32> to vector<16x32xf32>
    %26 = arith.addf %24, %25 : vector<16x32xf32>
    %c0_10 = arith.constant 0 : index
    %c0_11 = arith.constant 0 : index
    %27 = vector.load %arg2[%c0_10, %c0_11] : memref<16x32xf32, #tpu.memory_space<vmem>>, vector<16x32xf32>
    %cst_12 = arith.constant dense<0.000000e+00> : vector<16xf32>
    %28 = vector.multi_reduction <add>, %27, %cst_12 [1] : vector<16x32xf32> to vector<16xf32>
    %29 = vector.shape_cast %28 : vector<16xf32> to vector<16x1xf32>
    %cst_13 = arith.constant 3.200000e+01 : f32
    %30 = vector.broadcast %cst_13 : f32 to vector<16x1xf32>
    %31 = arith.divf %29, %30 : vector<16x1xf32>
    %32 = vector.broadcast %31 : vector<16x1xf32> to vector<16x32xf32>
    %33 = arith.subf %27, %32 : vector<16x32xf32>
    %34 = arith.mulf %33, %33 : vector<16x32xf32>
    %cst_14 = arith.constant dense<0.000000e+00> : vector<16xf32>
    %35 = vector.multi_reduction <add>, %34, %cst_14 [1] : vector<16x32xf32> to vector<16xf32>
    %36 = vector.shape_cast %35 : vector<16xf32> to vector<16x1xf32>
    %cst_15 = arith.constant 3.200000e+01 : f32
    %37 = vector.broadcast %cst_15 : f32 to vector<16x1xf32>
    %38 = arith.divf %36, %37 : vector<16x1xf32>
    %39 = vector.broadcast %31 : vector<16x1xf32> to vector<16x32xf32>
    %40 = arith.subf %27, %39 : vector<16x32xf32>
    %cst_16 = arith.constant 9.99999974E-6 : f32
    %41 = vector.broadcast %cst_16 : f32 to vector<16x1xf32>
    %42 = arith.addf %38, %41 : vector<16x1xf32>
    %43 = math.rsqrt %42 : vector<16x1xf32>
    %44 = vector.broadcast %43 : vector<16x1xf32> to vector<16x32xf32>
    %45 = arith.mulf %40, %44 : vector<16x32xf32>
    %46 = vector.broadcast %1 : vector<1x32xf32> to vector<16x32xf32>
    %47 = arith.mulf %45, %46 : vector<16x32xf32>
    %48 = vector.broadcast %3 : vector<1x32xf32> to vector<16x32xf32>
    %49 = arith.addf %47, %48 : vector<16x32xf32>
    %c0_17 = arith.constant 0 : index
    %c0_18 = arith.constant 0 : index
    %50 = vector.load %arg3[%c0_17, %c0_18] : memref<16x32xf32, #tpu.memory_space<vmem>>, vector<16x32xf32>
    %cst_19 = arith.constant dense<0.000000e+00> : vector<16xf32>
    %51 = vector.multi_reduction <add>, %50, %cst_19 [1] : vector<16x32xf32> to vector<16xf32>
    %52 = vector.shape_cast %51 : vector<16xf32> to vector<16x1xf32>
    %cst_20 = arith.constant 3.200000e+01 : f32
    %53 = vector.broadcast %cst_20 : f32 to vector<16x1xf32>
    %54 = arith.divf %52, %53 : vector<16x1xf32>
    %55 = vector.broadcast %54 : vector<16x1xf32> to vector<16x32xf32>
    %56 = arith.subf %50, %55 : vector<16x32xf32>
    %57 = arith.mulf %56, %56 : vector<16x32xf32>
    %cst_21 = arith.constant dense<0.000000e+00> : vector<16xf32>
    %58 = vector.multi_reduction <add>, %57, %cst_21 [1] : vector<16x32xf32> to vector<16xf32>
    %59 = vector.shape_cast %58 : vector<16xf32> to vector<16x1xf32>
    %cst_22 = arith.constant 3.200000e+01 : f32
    %60 = vector.broadcast %cst_22 : f32 to vector<16x1xf32>
    %61 = arith.divf %59, %60 : vector<16x1xf32>
    %62 = vector.broadcast %54 : vector<16x1xf32> to vector<16x32xf32>
    %63 = arith.subf %50, %62 : vector<16x32xf32>
    %cst_23 = arith.constant 9.99999974E-6 : f32
    %64 = vector.broadcast %cst_23 : f32 to vector<16x1xf32>
    %65 = arith.addf %61, %64 : vector<16x1xf32>
    %66 = math.rsqrt %65 : vector<16x1xf32>
    %67 = vector.broadcast %66 : vector<16x1xf32> to vector<16x32xf32>
    %68 = arith.mulf %63, %67 : vector<16x32xf32>
    %69 = vector.broadcast %1 : vector<1x32xf32> to vector<16x32xf32>
    %70 = arith.mulf %68, %69 : vector<16x32xf32>
    %71 = vector.broadcast %3 : vector<1x32xf32> to vector<16x32xf32>
    %72 = arith.addf %70, %71 : vector<16x32xf32>
    %c0_24 = arith.constant 0 : index
    %c0_25 = arith.constant 0 : index
    %c0_26 = arith.constant 0 : index
    %73 = vector.load %arg5[%c0_24, %c0_25, %c0_26] : memref<3x32x32xf32, #tpu.memory_space<vmem>>, vector<1x32x32xf32>
    %74 = vector.shape_cast %73 : vector<1x32x32xf32> to vector<32x32xf32>
    %cst_27 = arith.constant dense<0.000000e+00> : vector<16x32xf32>
    %75 = tpu.matmul %26, %74, %cst_27 {dimension_numbers = #tpu.dot_dimension_numbers<[1], [0], [0], [1], [0, 0, 1, 1], [], []>} : vector<16x32xf32>, vector<32x32xf32>, vector<16x32xf32> -> vector<16x32xf32>
    %c0_28 = arith.constant 0 : index
    %c0_29 = arith.constant 0 : index
    %c0_30 = arith.constant 0 : index
    %76 = vector.load %arg6[%c0_28, %c0_29, %c0_30] : memref<3x1x32xf32, #tpu.memory_space<vmem>>, vector<1x1x32xf32>
    %77 = vector.shape_cast %76 : vector<1x1x32xf32> to vector<1x32xf32>
    %78 = vector.broadcast %77 : vector<1x32xf32> to vector<16x32xf32>
    %79 = arith.addf %75, %78 : vector<16x32xf32>
    %cst_31 = arith.constant 0.353553385 : f32
    %80 = vector.broadcast %cst_31 : f32 to vector<16x32xf32>
    %81 = arith.mulf %79, %80 : vector<16x32xf32>
    %c1_32 = arith.constant 1 : index
    %c0_33 = arith.constant 0 : index
    %c0_34 = arith.constant 0 : index
    %82 = vector.load %arg5[%c1_32, %c0_33, %c0_34] : memref<3x32x32xf32, #tpu.memory_space<vmem>>, vector<1x32x32xf32>
    %83 = vector.shape_cast %82 : vector<1x32x32xf32> to vector<32x32xf32>
    %cst_35 = arith.constant dense<0.000000e+00> : vector<16x32xf32>
    %84 = tpu.matmul %49, %83, %cst_35 {dimension_numbers = #tpu.dot_dimension_numbers<[1], [0], [0], [1], [0, 0, 1, 1], [], []>} : vector<16x32xf32>, vector<32x32xf32>, vector<16x32xf32> -> vector<16x32xf32>
    %c1_36 = arith.constant 1 : index
    %c0_37 = arith.constant 0 : index
    %c0_38 = arith.constant 0 : index
    %85 = vector.load %arg6[%c1_36, %c0_37, %c0_38] : memref<3x1x32xf32, #tpu.memory_space<vmem>>, vector<1x1x32xf32>
    %86 = vector.shape_cast %85 : vector<1x1x32xf32> to vector<1x32xf32>
    %87 = vector.broadcast %86 : vector<1x32xf32> to vector<16x32xf32>
    %88 = arith.addf %84, %87 : vector<16x32xf32>
    %c2 = arith.constant 2 : index
    %c0_39 = arith.constant 0 : index
    %c0_40 = arith.constant 0 : index
    %89 = vector.load %arg5[%c2, %c0_39, %c0_40] : memref<3x32x32xf32, #tpu.memory_space<vmem>>, vector<1x32x32xf32>
    %90 = vector.shape_cast %89 : vector<1x32x32xf32> to vector<32x32xf32>
    %cst_41 = arith.constant dense<0.000000e+00> : vector<16x32xf32>
    %91 = tpu.matmul %72, %90, %cst_41 {dimension_numbers = #tpu.dot_dimension_numbers<[1], [0], [0], [1], [0, 0, 1, 1], [], []>} : vector<16x32xf32>, vector<32x32xf32>, vector<16x32xf32> -> vector<16x32xf32>
    %c2_42 = arith.constant 2 : index
    %c0_43 = arith.constant 0 : index
    %c0_44 = arith.constant 0 : index
    %92 = vector.load %arg6[%c2_42, %c0_43, %c0_44] : memref<3x1x32xf32, #tpu.memory_space<vmem>>, vector<1x1x32xf32>
    %93 = vector.shape_cast %92 : vector<1x1x32xf32> to vector<1x32xf32>
    %94 = vector.broadcast %93 : vector<1x32xf32> to vector<16x32xf32>
    %95 = arith.addf %91, %94 : vector<16x32xf32>
    %c0_45 = arith.constant 0 : index
    %c0_46 = arith.constant 0 : index
    %96 = vector.load %arg8[%c0_45, %c0_46] : memref<1x32xf32, #tpu.memory_space<vmem>>, vector<1x32xf32>
    %97 = vector.extract_strided_slice %81 {offsets = [0, 0], sizes = [8, 32], strides = [1, 1]} : vector<16x32xf32> to vector<8x32xf32>
    %98 = vector.extract_strided_slice %88 {offsets = [0, 0], sizes = [8, 32], strides = [1, 1]} : vector<16x32xf32> to vector<8x32xf32>
    %99 = vector.extract_strided_slice %95 {offsets = [0, 0], sizes = [8, 32], strides = [1, 1]} : vector<16x32xf32> to vector<8x32xf32>
    %100 = vector.shape_cast %96 : vector<1x32xf32> to vector<1x32xf32>
    %101 = vector.broadcast %100 : vector<1x32xf32> to vector<8x32xf32>
    %102 = vector.extract_strided_slice %97 {offsets = [0, 0], sizes = [8, 8], strides = [1, 1]} : vector<8x32xf32> to vector<8x8xf32>
    %103 = vector.extract_strided_slice %98 {offsets = [0, 0], sizes = [8, 8], strides = [1, 1]} : vector<8x32xf32> to vector<8x8xf32>
    %104 = vector.extract_strided_slice %99 {offsets = [0, 0], sizes = [8, 8], strides = [1, 1]} : vector<8x32xf32> to vector<8x8xf32>
    %cst_47 = arith.constant dense<0.000000e+00> : vector<8x8xf32>
    %105 = tpu.matmul %102, %103, %cst_47 {dimension_numbers = #tpu.dot_dimension_numbers<[1], [1], [0], [0], [0, 0, 1, 0], [], []>} : vector<8x8xf32>, vector<8x8xf32>, vector<8x8xf32> -> vector<8x8xf32>
    %cst_48 = arith.constant dense<0xFF800000> : vector<8xf32>
    %106 = vector.multi_reduction <maximumf>, %105, %cst_48 [1] : vector<8x8xf32> to vector<8xf32>
    %107 = vector.shape_cast %106 : vector<8xf32> to vector<8x1xf32>
    %108 = vector.broadcast %107 : vector<8x1xf32> to vector<8x8xf32>
    %109 = arith.subf %105, %108 : vector<8x8xf32>
    %110 = math.exp %109 : vector<8x8xf32>
    %cst_49 = arith.constant dense<0.000000e+00> : vector<8xf32>
    %111 = vector.multi_reduction <add>, %110, %cst_49 [1] : vector<8x8xf32> to vector<8xf32>
    %112 = vector.shape_cast %111 : vector<8xf32> to vector<8x1xf32>
    %113 = tpu.reciprocal %112 {approx = true} : vector<8x1xf32> -> vector<8x1xf32>
    %cst_50 = arith.constant dense<0.000000e+00> : vector<8x8xf32>
    %114 = tpu.matmul %110, %104, %cst_50 {dimension_numbers = #tpu.dot_dimension_numbers<[1], [0], [0], [1], [0, 0, 1, 1], [], []>} : vector<8x8xf32>, vector<8x8xf32>, vector<8x8xf32> -> vector<8x8xf32>
    %115 = vector.broadcast %113 : vector<8x1xf32> to vector<8x8xf32>
    %116 = arith.mulf %114, %115 : vector<8x8xf32>
    %c0_51 = arith.constant 0 : index
    %c0_52 = arith.constant 0 : index
    %c0_53 = arith.constant 0 : index
    %117 = vector.load %arg7[%c0_51, %c0_52, %c0_53] : memref<4x8x32xf32, #tpu.memory_space<vmem>>, vector<1x8x32xf32>
    %118 = vector.shape_cast %117 : vector<1x8x32xf32> to vector<8x32xf32>
    %cst_54 = arith.constant dense<0.000000e+00> : vector<8x32xf32>
    %119 = tpu.matmul %116, %118, %cst_54 {dimension_numbers = #tpu.dot_dimension_numbers<[1], [0], [0], [1], [0, 0, 1, 1], [], []>} : vector<8x8xf32>, vector<8x32xf32>, vector<8x32xf32> -> vector<8x32xf32>
    %120 = arith.addf %101, %119 : vector<8x32xf32>
    %121 = vector.extract_strided_slice %97 {offsets = [0, 8], sizes = [8, 8], strides = [1, 1]} : vector<8x32xf32> to vector<8x8xf32>
    %122 = vector.extract_strided_slice %98 {offsets = [0, 8], sizes = [8, 8], strides = [1, 1]} : vector<8x32xf32> to vector<8x8xf32>
    %123 = vector.extract_strided_slice %99 {offsets = [0, 8], sizes = [8, 8], strides = [1, 1]} : vector<8x32xf32> to vector<8x8xf32>
    %cst_55 = arith.constant dense<0.000000e+00> : vector<8x8xf32>
    %124 = tpu.matmul %121, %122, %cst_55 {dimension_numbers = #tpu.dot_dimension_numbers<[1], [1], [0], [0], [0, 0, 1, 0], [], []>} : vector<8x8xf32>, vector<8x8xf32>, vector<8x8xf32> -> vector<8x8xf32>
    %cst_56 = arith.constant dense<0xFF800000> : vector<8xf32>
    %125 = vector.multi_reduction <maximumf>, %124, %cst_56 [1] : vector<8x8xf32> to vector<8xf32>
    %126 = vector.shape_cast %125 : vector<8xf32> to vector<8x1xf32>
    %127 = vector.broadcast %126 : vector<8x1xf32> to vector<8x8xf32>
    %128 = arith.subf %124, %127 : vector<8x8xf32>
    %129 = math.exp %128 : vector<8x8xf32>
    %cst_57 = arith.constant dense<0.000000e+00> : vector<8xf32>
    %130 = vector.multi_reduction <add>, %129, %cst_57 [1] : vector<8x8xf32> to vector<8xf32>
    %131 = vector.shape_cast %130 : vector<8xf32> to vector<8x1xf32>
    %132 = tpu.reciprocal %131 {approx = true} : vector<8x1xf32> -> vector<8x1xf32>
    %cst_58 = arith.constant dense<0.000000e+00> : vector<8x8xf32>
    %133 = tpu.matmul %129, %123, %cst_58 {dimension_numbers = #tpu.dot_dimension_numbers<[1], [0], [0], [1], [0, 0, 1, 1], [], []>} : vector<8x8xf32>, vector<8x8xf32>, vector<8x8xf32> -> vector<8x8xf32>
    %134 = vector.broadcast %132 : vector<8x1xf32> to vector<8x8xf32>
    %135 = arith.mulf %133, %134 : vector<8x8xf32>
    %c1_59 = arith.constant 1 : index
    %c0_60 = arith.constant 0 : index
    %c0_61 = arith.constant 0 : index
    %136 = vector.load %arg7[%c1_59, %c0_60, %c0_61] : memref<4x8x32xf32, #tpu.memory_space<vmem>>, vector<1x8x32xf32>
    %137 = vector.shape_cast %136 : vector<1x8x32xf32> to vector<8x32xf32>
    %cst_62 = arith.constant dense<0.000000e+00> : vector<8x32xf32>
    %138 = tpu.matmul %135, %137, %cst_62 {dimension_numbers = #tpu.dot_dimension_numbers<[1], [0], [0], [1], [0, 0, 1, 1], [], []>} : vector<8x8xf32>, vector<8x32xf32>, vector<8x32xf32> -> vector<8x32xf32>
    %139 = arith.addf %120, %138 : vector<8x32xf32>
    %140 = vector.extract_strided_slice %97 {offsets = [0, 16], sizes = [8, 8], strides = [1, 1]} : vector<8x32xf32> to vector<8x8xf32>
    %141 = vector.extract_strided_slice %98 {offsets = [0, 16], sizes = [8, 8], strides = [1, 1]} : vector<8x32xf32> to vector<8x8xf32>
    %142 = vector.extract_strided_slice %99 {offsets = [0, 16], sizes = [8, 8], strides = [1, 1]} : vector<8x32xf32> to vector<8x8xf32>
    %cst_63 = arith.constant dense<0.000000e+00> : vector<8x8xf32>
    %143 = tpu.matmul %140, %141, %cst_63 {dimension_numbers = #tpu.dot_dimension_numbers<[1], [1], [0], [0], [0, 0, 1, 0], [], []>} : vector<8x8xf32>, vector<8x8xf32>, vector<8x8xf32> -> vector<8x8xf32>
    %cst_64 = arith.constant dense<0xFF800000> : vector<8xf32>
    %144 = vector.multi_reduction <maximumf>, %143, %cst_64 [1] : vector<8x8xf32> to vector<8xf32>
    %145 = vector.shape_cast %144 : vector<8xf32> to vector<8x1xf32>
    %146 = vector.broadcast %145 : vector<8x1xf32> to vector<8x8xf32>
    %147 = arith.subf %143, %146 : vector<8x8xf32>
    %148 = math.exp %147 : vector<8x8xf32>
    %cst_65 = arith.constant dense<0.000000e+00> : vector<8xf32>
    %149 = vector.multi_reduction <add>, %148, %cst_65 [1] : vector<8x8xf32> to vector<8xf32>
    %150 = vector.shape_cast %149 : vector<8xf32> to vector<8x1xf32>
    %151 = tpu.reciprocal %150 {approx = true} : vector<8x1xf32> -> vector<8x1xf32>
    %cst_66 = arith.constant dense<0.000000e+00> : vector<8x8xf32>
    %152 = tpu.matmul %148, %142, %cst_66 {dimension_numbers = #tpu.dot_dimension_numbers<[1], [0], [0], [1], [0, 0, 1, 1], [], []>} : vector<8x8xf32>, vector<8x8xf32>, vector<8x8xf32> -> vector<8x8xf32>
    %153 = vector.broadcast %151 : vector<8x1xf32> to vector<8x8xf32>
    %154 = arith.mulf %152, %153 : vector<8x8xf32>
    %c2_67 = arith.constant 2 : index
    %c0_68 = arith.constant 0 : index
    %c0_69 = arith.constant 0 : index
    %155 = vector.load %arg7[%c2_67, %c0_68, %c0_69] : memref<4x8x32xf32, #tpu.memory_space<vmem>>, vector<1x8x32xf32>
    %156 = vector.shape_cast %155 : vector<1x8x32xf32> to vector<8x32xf32>
    %cst_70 = arith.constant dense<0.000000e+00> : vector<8x32xf32>
    %157 = tpu.matmul %154, %156, %cst_70 {dimension_numbers = #tpu.dot_dimension_numbers<[1], [0], [0], [1], [0, 0, 1, 1], [], []>} : vector<8x8xf32>, vector<8x32xf32>, vector<8x32xf32> -> vector<8x32xf32>
    %158 = arith.addf %139, %157 : vector<8x32xf32>
    %159 = vector.extract_strided_slice %97 {offsets = [0, 24], sizes = [8, 8], strides = [1, 1]} : vector<8x32xf32> to vector<8x8xf32>
    %160 = vector.extract_strided_slice %98 {offsets = [0, 24], sizes = [8, 8], strides = [1, 1]} : vector<8x32xf32> to vector<8x8xf32>
    %161 = vector.extract_strided_slice %99 {offsets = [0, 24], sizes = [8, 8], strides = [1, 1]} : vector<8x32xf32> to vector<8x8xf32>
    %cst_71 = arith.constant dense<0.000000e+00> : vector<8x8xf32>
    %162 = tpu.matmul %159, %160, %cst_71 {dimension_numbers = #tpu.dot_dimension_numbers<[1], [1], [0], [0], [0, 0, 1, 0], [], []>} : vector<8x8xf32>, vector<8x8xf32>, vector<8x8xf32> -> vector<8x8xf32>
    %cst_72 = arith.constant dense<0xFF800000> : vector<8xf32>
    %163 = vector.multi_reduction <maximumf>, %162, %cst_72 [1] : vector<8x8xf32> to vector<8xf32>
    %164 = vector.shape_cast %163 : vector<8xf32> to vector<8x1xf32>
    %165 = vector.broadcast %164 : vector<8x1xf32> to vector<8x8xf32>
    %166 = arith.subf %162, %165 : vector<8x8xf32>
    %167 = math.exp %166 : vector<8x8xf32>
    %cst_73 = arith.constant dense<0.000000e+00> : vector<8xf32>
    %168 = vector.multi_reduction <add>, %167, %cst_73 [1] : vector<8x8xf32> to vector<8xf32>
    %169 = vector.shape_cast %168 : vector<8xf32> to vector<8x1xf32>
    %170 = tpu.reciprocal %169 {approx = true} : vector<8x1xf32> -> vector<8x1xf32>
    %cst_74 = arith.constant dense<0.000000e+00> : vector<8x8xf32>
    %171 = tpu.matmul %167, %161, %cst_74 {dimension_numbers = #tpu.dot_dimension_numbers<[1], [0], [0], [1], [0, 0, 1, 1], [], []>} : vector<8x8xf32>, vector<8x8xf32>, vector<8x8xf32> -> vector<8x8xf32>
    %172 = vector.broadcast %170 : vector<8x1xf32> to vector<8x8xf32>
    %173 = arith.mulf %171, %172 : vector<8x8xf32>
    %c3 = arith.constant 3 : index
    %c0_75 = arith.constant 0 : index
    %c0_76 = arith.constant 0 : index
    %174 = vector.load %arg7[%c3, %c0_75, %c0_76] : memref<4x8x32xf32, #tpu.memory_space<vmem>>, vector<1x8x32xf32>
    %175 = vector.shape_cast %174 : vector<1x8x32xf32> to vector<8x32xf32>
    %cst_77 = arith.constant dense<0.000000e+00> : vector<8x32xf32>
    %176 = tpu.matmul %173, %175, %cst_77 {dimension_numbers = #tpu.dot_dimension_numbers<[1], [0], [0], [1], [0, 0, 1, 1], [], []>} : vector<8x8xf32>, vector<8x32xf32>, vector<8x32xf32> -> vector<8x32xf32>
    %177 = arith.addf %158, %176 : vector<8x32xf32>
    %c0_78 = arith.constant 0 : index
    %c0_79 = arith.constant 0 : index
    %178 = vector.load %arg9[%c0_78, %c0_79] : memref<16x32xf32, #tpu.memory_space<vmem>>, vector<8x32xf32>
    tpu.vector_store %arg9[%c0_78, %c0_79], %177 {strides = array<i32>} : memref<16x32xf32, #tpu.memory_space<vmem>>, vector<8x32xf32>,
    %179 = vector.extract_strided_slice %81 {offsets = [8, 0], sizes = [8, 32], strides = [1, 1]} : vector<16x32xf32> to vector<8x32xf32>
    %180 = vector.extract_strided_slice %88 {offsets = [8, 0], sizes = [8, 32], strides = [1, 1]} : vector<16x32xf32> to vector<8x32xf32>
    %181 = vector.extract_strided_slice %95 {offsets = [8, 0], sizes = [8, 32], strides = [1, 1]} : vector<16x32xf32> to vector<8x32xf32>
    %182 = vector.shape_cast %96 : vector<1x32xf32> to vector<1x32xf32>
    %183 = vector.broadcast %182 : vector<1x32xf32> to vector<8x32xf32>
    %184 = vector.extract_strided_slice %179 {offsets = [0, 0], sizes = [8, 8], strides = [1, 1]} : vector<8x32xf32> to vector<8x8xf32>
    %185 = vector.extract_strided_slice %180 {offsets = [0, 0], sizes = [8, 8], strides = [1, 1]} : vector<8x32xf32> to vector<8x8xf32>
    %186 = vector.extract_strided_slice %181 {offsets = [0, 0], sizes = [8, 8], strides = [1, 1]} : vector<8x32xf32> to vector<8x8xf32>
    %cst_80 = arith.constant dense<0.000000e+00> : vector<8x8xf32>
    %187 = tpu.matmul %184, %185, %cst_80 {dimension_numbers = #tpu.dot_dimension_numbers<[1], [1], [0], [0], [0, 0, 1, 0], [], []>} : vector<8x8xf32>, vector<8x8xf32>, vector<8x8xf32> -> vector<8x8xf32>
    %cst_81 = arith.constant dense<0xFF800000> : vector<8xf32>
    %188 = vector.multi_reduction <maximumf>, %187, %cst_81 [1] : vector<8x8xf32> to vector<8xf32>
    %189 = vector.shape_cast %188 : vector<8xf32> to vector<8x1xf32>
    %190 = vector.broadcast %189 : vector<8x1xf32> to vector<8x8xf32>
    %191 = arith.subf %187, %190 : vector<8x8xf32>
    %192 = math.exp %191 : vector<8x8xf32>
    %cst_82 = arith.constant dense<0.000000e+00> : vector<8xf32>
    %193 = vector.multi_reduction <add>, %192, %cst_82 [1] : vector<8x8xf32> to vector<8xf32>
    %194 = vector.shape_cast %193 : vector<8xf32> to vector<8x1xf32>
    %195 = tpu.reciprocal %194 {approx = true} : vector<8x1xf32> -> vector<8x1xf32>
    %cst_83 = arith.constant dense<0.000000e+00> : vector<8x8xf32>
    %196 = tpu.matmul %192, %186, %cst_83 {dimension_numbers = #tpu.dot_dimension_numbers<[1], [0], [0], [1], [0, 0, 1, 1], [], []>} : vector<8x8xf32>, vector<8x8xf32>, vector<8x8xf32> -> vector<8x8xf32>
    %197 = vector.broadcast %195 : vector<8x1xf32> to vector<8x8xf32>
    %198 = arith.mulf %196, %197 : vector<8x8xf32>
    %c0_84 = arith.constant 0 : index
    %c0_85 = arith.constant 0 : index
    %c0_86 = arith.constant 0 : index
    %199 = vector.load %arg7[%c0_84, %c0_85, %c0_86] : memref<4x8x32xf32, #tpu.memory_space<vmem>>, vector<1x8x32xf32>
    %200 = vector.shape_cast %199 : vector<1x8x32xf32> to vector<8x32xf32>
    %cst_87 = arith.constant dense<0.000000e+00> : vector<8x32xf32>
    %201 = tpu.matmul %198, %200, %cst_87 {dimension_numbers = #tpu.dot_dimension_numbers<[1], [0], [0], [1], [0, 0, 1, 1], [], []>} : vector<8x8xf32>, vector<8x32xf32>, vector<8x32xf32> -> vector<8x32xf32>
    %202 = arith.addf %183, %201 : vector<8x32xf32>
    %203 = vector.extract_strided_slice %179 {offsets = [0, 8], sizes = [8, 8], strides = [1, 1]} : vector<8x32xf32> to vector<8x8xf32>
    %204 = vector.extract_strided_slice %180 {offsets = [0, 8], sizes = [8, 8], strides = [1, 1]} : vector<8x32xf32> to vector<8x8xf32>
    %205 = vector.extract_strided_slice %181 {offsets = [0, 8], sizes = [8, 8], strides = [1, 1]} : vector<8x32xf32> to vector<8x8xf32>
    %cst_88 = arith.constant dense<0.000000e+00> : vector<8x8xf32>
    %206 = tpu.matmul %203, %204, %cst_88 {dimension_numbers = #tpu.dot_dimension_numbers<[1], [1], [0], [0], [0, 0, 1, 0], [], []>} : vector<8x8xf32>, vector<8x8xf32>, vector<8x8xf32> -> vector<8x8xf32>
    %cst_89 = arith.constant dense<0xFF800000> : vector<8xf32>
    %207 = vector.multi_reduction <maximumf>, %206, %cst_89 [1] : vector<8x8xf32> to vector<8xf32>
    %208 = vector.shape_cast %207 : vector<8xf32> to vector<8x1xf32>
    %209 = vector.broadcast %208 : vector<8x1xf32> to vector<8x8xf32>
    %210 = arith.subf %206, %209 : vector<8x8xf32>
    %211 = math.exp %210 : vector<8x8xf32>
    %cst_90 = arith.constant dense<0.000000e+00> : vector<8xf32>
    %212 = vector.multi_reduction <add>, %211, %cst_90 [1] : vector<8x8xf32> to vector<8xf32>
    %213 = vector.shape_cast %212 : vector<8xf32> to vector<8x1xf32>
    %214 = tpu.reciprocal %213 {approx = true} : vector<8x1xf32> -> vector<8x1xf32>
    %cst_91 = arith.constant dense<0.000000e+00> : vector<8x8xf32>
    %215 = tpu.matmul %211, %205, %cst_91 {dimension_numbers = #tpu.dot_dimension_numbers<[1], [0], [0], [1], [0, 0, 1, 1], [], []>} : vector<8x8xf32>, vector<8x8xf32>, vector<8x8xf32> -> vector<8x8xf32>
    %216 = vector.broadcast %214 : vector<8x1xf32> to vector<8x8xf32>
    %217 = arith.mulf %215, %216 : vector<8x8xf32>
    %c1_92 = arith.constant 1 : index
    %c0_93 = arith.constant 0 : index
    %c0_94 = arith.constant 0 : index
    %218 = vector.load %arg7[%c1_92, %c0_93, %c0_94] : memref<4x8x32xf32, #tpu.memory_space<vmem>>, vector<1x8x32xf32>
    %219 = vector.shape_cast %218 : vector<1x8x32xf32> to vector<8x32xf32>
    %cst_95 = arith.constant dense<0.000000e+00> : vector<8x32xf32>
    %220 = tpu.matmul %217, %219, %cst_95 {dimension_numbers = #tpu.dot_dimension_numbers<[1], [0], [0], [1], [0, 0, 1, 1], [], []>} : vector<8x8xf32>, vector<8x32xf32>, vector<8x32xf32> -> vector<8x32xf32>
    %221 = arith.addf %202, %220 : vector<8x32xf32>
    %222 = vector.extract_strided_slice %179 {offsets = [0, 16], sizes = [8, 8], strides = [1, 1]} : vector<8x32xf32> to vector<8x8xf32>
    %223 = vector.extract_strided_slice %180 {offsets = [0, 16], sizes = [8, 8], strides = [1, 1]} : vector<8x32xf32> to vector<8x8xf32>
    %224 = vector.extract_strided_slice %181 {offsets = [0, 16], sizes = [8, 8], strides = [1, 1]} : vector<8x32xf32> to vector<8x8xf32>
    %cst_96 = arith.constant dense<0.000000e+00> : vector<8x8xf32>
    %225 = tpu.matmul %222, %223, %cst_96 {dimension_numbers = #tpu.dot_dimension_numbers<[1], [1], [0], [0], [0, 0, 1, 0], [], []>} : vector<8x8xf32>, vector<8x8xf32>, vector<8x8xf32> -> vector<8x8xf32>
    %cst_97 = arith.constant dense<0xFF800000> : vector<8xf32>
    %226 = vector.multi_reduction <maximumf>, %225, %cst_97 [1] : vector<8x8xf32> to vector<8xf32>
    %227 = vector.shape_cast %226 : vector<8xf32> to vector<8x1xf32>
    %228 = vector.broadcast %227 : vector<8x1xf32> to vector<8x8xf32>
    %229 = arith.subf %225, %228 : vector<8x8xf32>
    %230 = math.exp %229 : vector<8x8xf32>
    %cst_98 = arith.constant dense<0.000000e+00> : vector<8xf32>
    %231 = vector.multi_reduction <add>, %230, %cst_98 [1] : vector<8x8xf32> to vector<8xf32>
    %232 = vector.shape_cast %231 : vector<8xf32> to vector<8x1xf32>
    %233 = tpu.reciprocal %232 {approx = true} : vector<8x1xf32> -> vector<8x1xf32>
    %cst_99 = arith.constant dense<0.000000e+00> : vector<8x8xf32>
    %234 = tpu.matmul %230, %224, %cst_99 {dimension_numbers = #tpu.dot_dimension_numbers<[1], [0], [0], [1], [0, 0, 1, 1], [], []>} : vector<8x8xf32>, vector<8x8xf32>, vector<8x8xf32> -> vector<8x8xf32>
    %235 = vector.broadcast %233 : vector<8x1xf32> to vector<8x8xf32>
    %236 = arith.mulf %234, %235 : vector<8x8xf32>
    %c2_100 = arith.constant 2 : index
    %c0_101 = arith.constant 0 : index
    %c0_102 = arith.constant 0 : index
    %237 = vector.load %arg7[%c2_100, %c0_101, %c0_102] : memref<4x8x32xf32, #tpu.memory_space<vmem>>, vector<1x8x32xf32>
    %238 = vector.shape_cast %237 : vector<1x8x32xf32> to vector<8x32xf32>
    %cst_103 = arith.constant dense<0.000000e+00> : vector<8x32xf32>
    %239 = tpu.matmul %236, %238, %cst_103 {dimension_numbers = #tpu.dot_dimension_numbers<[1], [0], [0], [1], [0, 0, 1, 1], [], []>} : vector<8x8xf32>, vector<8x32xf32>, vector<8x32xf32> -> vector<8x32xf32>
    %240 = arith.addf %221, %239 : vector<8x32xf32>
    %241 = vector.extract_strided_slice %179 {offsets = [0, 24], sizes = [8, 8], strides = [1, 1]} : vector<8x32xf32> to vector<8x8xf32>
    %242 = vector.extract_strided_slice %180 {offsets = [0, 24], sizes = [8, 8], strides = [1, 1]} : vector<8x32xf32> to vector<8x8xf32>
    %243 = vector.extract_strided_slice %181 {offsets = [0, 24], sizes = [8, 8], strides = [1, 1]} : vector<8x32xf32> to vector<8x8xf32>
    %cst_104 = arith.constant dense<0.000000e+00> : vector<8x8xf32>
    %244 = tpu.matmul %241, %242, %cst_104 {dimension_numbers = #tpu.dot_dimension_numbers<[1], [1], [0], [0], [0, 0, 1, 0], [], []>} : vector<8x8xf32>, vector<8x8xf32>, vector<8x8xf32> -> vector<8x8xf32>
    %cst_105 = arith.constant dense<0xFF800000> : vector<8xf32>
    %245 = vector.multi_reduction <maximumf>, %244, %cst_105 [1] : vector<8x8xf32> to vector<8xf32>
    %246 = vector.shape_cast %245 : vector<8xf32> to vector<8x1xf32>
    %247 = vector.broadcast %246 : vector<8x1xf32> to vector<8x8xf32>
    %248 = arith.subf %244, %247 : vector<8x8xf32>
    %249 = math.exp %248 : vector<8x8xf32>
    %cst_106 = arith.constant dense<0.000000e+00> : vector<8xf32>
    %250 = vector.multi_reduction <add>, %249, %cst_106 [1] : vector<8x8xf32> to vector<8xf32>
    %251 = vector.shape_cast %250 : vector<8xf32> to vector<8x1xf32>
    %252 = tpu.reciprocal %251 {approx = true} : vector<8x1xf32> -> vector<8x1xf32>
    %cst_107 = arith.constant dense<0.000000e+00> : vector<8x8xf32>
    %253 = tpu.matmul %249, %243, %cst_107 {dimension_numbers = #tpu.dot_dimension_numbers<[1], [0], [0], [1], [0, 0, 1, 1], [], []>} : vector<8x8xf32>, vector<8x8xf32>, vector<8x8xf32> -> vector<8x8xf32>
    %254 = vector.broadcast %252 : vector<8x1xf32> to vector<8x8xf32>
    %255 = arith.mulf %253, %254 : vector<8x8xf32>
    %c3_108 = arith.constant 3 : index
    %c0_109 = arith.constant 0 : index
    %c0_110 = arith.constant 0 : index
    %256 = vector.load %arg7[%c3_108, %c0_109, %c0_110] : memref<4x8x32xf32, #tpu.memory_space<vmem>>, vector<1x8x32xf32>
    %257 = vector.shape_cast %256 : vector<1x8x32xf32> to vector<8x32xf32>
    %cst_111 = arith.constant dense<0.000000e+00> : vector<8x32xf32>
    %258 = tpu.matmul %255, %257, %cst_111 {dimension_numbers = #tpu.dot_dimension_numbers<[1], [0], [0], [1], [0, 0, 1, 1], [], []>} : vector<8x8xf32>, vector<8x32xf32>, vector<8x32xf32> -> vector<8x32xf32>
    %259 = arith.addf %240, %258 : vector<8x32xf32>
    %c8 = arith.constant 8 : index
    %c0_112 = arith.constant 0 : index
    %260 = vector.load %arg9[%c8, %c0_112] : memref<16x32xf32, #tpu.memory_space<vmem>>, vector<8x32xf32>
    tpu.vector_store %arg9[%c8, %c0_112], %259 {strides = array<i32>} : memref<16x32xf32, #tpu.memory_space<vmem>>, vector<8x32xf32>,
    return
  }
  func.func @transform_0(%arg0: i32) -> (i32, i32) {
    %c0_i32 = arith.constant 0 : i32
    %c0_i32_0 = arith.constant 0 : i32
    return %arg0, %c0_i32 : i32, i32
  }
  func.func @transform_1(%arg0: i32) -> (i32, i32) {
    %c0_i32 = arith.constant 0 : i32
    %c0_i32_0 = arith.constant 0 : i32
    return %arg0, %c0_i32 : i32, i32
  }
  func.func @transform_2(%arg0: i32) -> (i32, i32) {
    %c0_i32 = arith.constant 0 : i32
    %c0_i32_0 = arith.constant 0 : i32
    return %arg0, %c0_i32 : i32, i32
  }
  func.func @transform_3(%arg0: i32) -> (i32, i32, i32) {
    %c0_i32 = arith.constant 0 : i32
    %c0_i32_0 = arith.constant 0 : i32
    %c0_i32_1 = arith.constant 0 : i32
    %c0_i32_2 = arith.constant 0 : i32
    return %c0_i32, %c0_i32_0, %c0_i32_1 : i32, i32, i32
  }
  func.func @transform_4(%arg0: i32) -> (i32, i32, i32) {
    %c0_i32 = arith.constant 0 : i32
    %c0_i32_0 = arith.constant 0 : i32
    %c0_i32_1 = arith.constant 0 : i32
    %c0_i32_2 = arith.constant 0 : i32
    return %c0_i32, %c0_i32_0, %c0_i32_1 : i32, i32, i32
  }
  func.func @transform_5(%arg0: i32) -> (i32, i32, i32) {
    %c0_i32 = arith.constant 0 : i32
    %c0_i32_0 = arith.constant 0 : i32
    %c0_i32_1 = arith.constant 0 : i32
    %c0_i32_2 = arith.constant 0 : i32
    return %c0_i32, %c0_i32_0, %c0_i32_1 : i32, i32, i32
  }
  func.func @transform_6(%arg0: i32) -> (i32, i32, i32) {
    %c0_i32 = arith.constant 0 : i32
    %c0_i32_0 = arith.constant 0 : i32
    %c0_i32_1 = arith.constant 0 : i32
    %c0_i32_2 = arith.constant 0 : i32
    return %c0_i32, %c0_i32_0, %c0_i32_1 : i32, i32, i32
  }
  func.func @transform_7(%arg0: i32) -> (i32, i32) {
    %c0_i32 = arith.constant 0 : i32
    %c0_i32_0 = arith.constant 0 : i32
    %c0_i32_1 = arith.constant 0 : i32
    return %c0_i32, %c0_i32_0 : i32, i32
  }
  func.func @transform_8(%arg0: i32) -> (i32, i32) {
    %c0_i32 = arith.constant 0 : i32
    %c0_i32_0 = arith.constant 0 : i32
    return %arg0, %c0_i32 : i32, i32
  }
}

</mosaic_0001>

<llo_original>
// kernel: tpu_custom_call.1
$region0: #{tpu_custom_call.1}
  #allocation0 [shape = 'u32[]', space=smem, size = 0x4, offset = 0x4, fixed_abs, tag = 'smem constant byte address 0x4 - core index']
  #allocation1 [shape = 'u32[72,128]{1,0:T(1,128)}', space=vmem, size = 0x9000, scoped, tag = 'internal scratch']
  %s0 = inlined_call_operand.hbm [shape: f32[16,32], index: 0, kind: input, shape index: {}]
  %s1 = inlined_call_operand.hbm [shape: f32[16,32], index: 1, kind: input, shape index: {}]
  %s2 = inlined_call_operand.hbm [shape: f32[16,32], index: 2, kind: input, shape index: {}]
  %s3 = inlined_call_operand.hbm [shape: f32[2,1,32], index: 3, kind: input, shape index: {}]
  %s4 = inlined_call_operand.hbm [shape: f32[3,32,32], index: 4, kind: input, shape index: {}]
  %s5 = inlined_call_operand.vmem [shape: f32[3,1,32], index: 5, kind: input, shape index: {}]
  %s6 = inlined_call_operand.hbm [shape: f32[4,8,32], index: 6, kind: input, shape index: {}]
  %s7 = inlined_call_operand.vmem [shape: f32[1,32], index: 7, kind: input, shape index: {}]
  %s8 = inlined_call_operand.hbm [shape: f32[16,32], index: 8, kind: output, shape index: {}]
  %s9 = sld [smem:[#allocation0]]
  $region66: #{tpu_custom_call.1} parent=0
    _
  %s11 = ssub.s32 1, %s9
  %s12 = scalar_select 0, %s11, %s9
  $region1: #{tpu_custom_call.1} parent=0
    #allocation2 [shape = 'u8[8192]{0}', space=vmem, size = 0x2000, scoped, tag = 'input window, operand 0, single buffered']
    #allocation3 [shape = 's32[1]{0}', space=sflag, size = 0x4, scoped, tag = 'scoped memory for tpu_custom_call.1']
    #allocation4 [shape = 's32[1]{0}', space=sflag, size = 0x4, scoped, tag = 'scoped memory for tpu_custom_call.1']
    #allocation5 [shape = 'u8[8192]{0}', space=vmem, size = 0x2000, scoped, tag = 'input window, operand 1, single buffered']
    #allocation6 [shape = 's32[1]{0}', space=sflag, size = 0x4, scoped, tag = 'scoped memory for tpu_custom_call.1']
    #allocation7 [shape = 'u8[8192]{0}', space=vmem, size = 0x2000, scoped, tag = 'input window, operand 2, single buffered']
    #allocation8 [shape = 'u8[1024]{0}', space=vmem, size = 0x400, scoped, tag = 'input window, operand 3, single buffered']
    #allocation9 [shape = 's32[1]{0}', space=sflag, size = 0x4, scoped, tag = 'scoped memory for tpu_custom_call.1']
    #allocation10 [shape = 'u8[49152]{0}', space=vmem, size = 0xc000, scoped, tag = 'input window, operand 4, single buffered']
    #allocation11 [shape = 'u8[16384]{0}', space=vmem, size = 0x4000, scoped, tag = 'input window, operand 6, single buffered']
    #allocation12 [shape = 's32[1]{0}', space=sflag, size = 0x4, scoped, tag = 'scoped memory for tpu_custom_call.1']
    #allocation13 [shape = 'u8[8192]{0}', space=vmem, size = 0x2000, scoped, tag = 'output window, operand 0, single buffered']
    %13 = vsyncpa [#allocation3], 0
    %14 = vsyncpa [#allocation6], 0
    %15 = vsyncpa [#allocation9], 0
    %16 = vsyncpa [#allocation12], 0
    %17 = vsyncpa [#allocation4], 0
    // Predicated region
    $region2: #{tpu_custom_call.1} parent=1 // pred_check
      _
    $region3: #{tpu_custom_call.1} parent=1 // pred_check_branch
      %19 = sbr.rel (0) target = $region5
    $region4: #{tpu_custom_call.1} parent=1 // pred_region
      %21 = vsyncadd [#allocation3], 0
      %s22 = sshll.u32 %s0, 4
      %s23 = int_to_ptr.hbm [resolvable:$true] %s22
      %s24 = sshll.u32 [#allocation2], 4
      %s25 = int_to_ptr.vmem [resolvable:$true] %s24
      %30 = dma.hbm_to_vmem [thread:$0]  %s23, 256, %s25, [#allocation3], 128, 128, 8
    $region5: #{tpu_custom_call.1} parent=1 // pred_fallthru
      _
    // Predicated region
    $region6: #{tpu_custom_call.1} parent=1 // pred_check
      _
    $region7: #{tpu_custom_call.1} parent=1 // pred_check_branch
      %32 = sbr.rel (0) target = $region9
    $region8: #{tpu_custom_call.1} parent=1 // pred_region
      %34 = vsyncadd [#allocation6], 0
      %s35 = sshll.u32 %s1, 4
      %s36 = int_to_ptr.hbm [resolvable:$true] %s35
      %s37 = sshll.u32 [#allocation5], 4
      %s38 = int_to_ptr.vmem [resolvable:$true] %s37
      %43 = dma.hbm_to_vmem [thread:$0]  %s36, 256, %s38, [#allocation6], 128, 128, 8
    $region9: #{tpu_custom_call.1} parent=1 // pred_fallthru
      _
    // Predicated region
    $region10: #{tpu_custom_call.1} parent=1 // pred_check
      _
    $region11: #{tpu_custom_call.1} parent=1 // pred_check_branch
      %45 = sbr.rel (0) target = $region13
    $region12: #{tpu_custom_call.1} parent=1 // pred_region
      %47 = vsyncadd [#allocation6], 0
      %s48 = sshll.u32 %s2, 4
      %s49 = int_to_ptr.hbm [resolvable:$true] %s48
      %s50 = sshll.u32 [#allocation7], 4
      %s51 = int_to_ptr.vmem [resolvable:$true] %s50
      %56 = dma.hbm_to_vmem [thread:$0]  %s49, 256, %s51, [#allocation6], 128, 128, 8
    $region13: #{tpu_custom_call.1} parent=1 // pred_fallthru
      _
    // Predicated region
    $region14: #{tpu_custom_call.1} parent=1 // pred_check
      _
    $region15: #{tpu_custom_call.1} parent=1 // pred_check_branch
      %58 = sbr.rel (0) target = $region17
    $region16: #{tpu_custom_call.1} parent=1 // pred_region
      %60 = vsyncadd [#allocation9], 0
      %s61 = sshll.u32 %s3, 4
      %s62 = int_to_ptr.hbm [resolvable:$true] %s61
      %s63 = sshll.u32 [#allocation8], 4
      %s64 = int_to_ptr.vmem [resolvable:$true] %s63
      %69 = dma.hbm_to_vmem [thread:$0]  %s62, 32, %s64, [#allocation9], 16, 16, 1
    $region17: #{tpu_custom_call.1} parent=1 // pred_fallthru
      _
    // Predicated region
    $region18: #{tpu_custom_call.1} parent=1 // pred_check
      _
    $region19: #{tpu_custom_call.1} parent=1 // pred_check_branch
      %71 = sbr.rel (0) target = $region21
    $region20: #{tpu_custom_call.1} parent=1 // pred_region
      %73 = vsyncadd [#allocation9], 0
      %s74 = sshll.u32 %s4, 4
      %s75 = int_to_ptr.hbm [resolvable:$true] %s74
      %s76 = sshll.u32 [#allocation10], 4
      %s77 = int_to_ptr.vmem [resolvable:$true] %s76
      %82 = dma.hbm_to_vmem [thread:$0]  %s75, 1536, %s77, [#allocation9], 128, 128, 8
    $region21: #{tpu_custom_call.1} parent=1 // pred_fallthru
      _
    // Predicated region
    $region22: #{tpu_custom_call.1} parent=1 // pred_check
      _
    $region23: #{tpu_custom_call.1} parent=1 // pred_check_branch
      %84 = sbr.rel (0) target = $region25
    $region24: #{tpu_custom_call.1} parent=1 // pred_region
      _
    $region25: #{tpu_custom_call.1} parent=1 // pred_fallthru
      _
    // Predicated region
    $region26: #{tpu_custom_call.1} parent=1 // pred_check
      _
    $region27: #{tpu_custom_call.1} parent=1 // pred_check_branch
      %86 = sbr.rel (0) target = $region29
    $region28: #{tpu_custom_call.1} parent=1 // pred_region
      %88 = vsyncadd [#allocation12], 0
      %s89 = sshll.u32 %s6, 4
      %s90 = int_to_ptr.hbm [resolvable:$true] %s89
      %s91 = sshll.u32 [#allocation11], 4
      %s92 = int_to_ptr.vmem [resolvable:$true] %s91
      %97 = dma.hbm_to_vmem [thread:$0]  %s90, 512, %s92, [#allocation12], 128, 128, 8
    $region29: #{tpu_custom_call.1} parent=1 // pred_fallthru
      _
    // Predicated region
    $region30: #{tpu_custom_call.1} parent=1 // pred_check
      _
    $region31: #{tpu_custom_call.1} parent=1 // pred_check_branch
      %99 = sbr.rel (0) target = $region33
    $region32: #{tpu_custom_call.1} parent=1 // pred_region
      _
    $region33: #{tpu_custom_call.1} parent=1 // pred_fallthru
      _
    // Predicated region
    $region34: #{tpu_custom_call.1} parent=1 // pred_check
      _
    $region35: #{tpu_custom_call.1} parent=1 // pred_check_branch
      %101 = sbr.rel (0) target = $region37
    $region36: #{tpu_custom_call.1} parent=1 // pred_region
      %103 = dma.done [#allocation3], 256
    $region37: #{tpu_custom_call.1} parent=1 // pred_fallthru
      _
    // Predicated region
    $region38: #{tpu_custom_call.1} parent=1 // pred_check
      _
    $region39: #{tpu_custom_call.1} parent=1 // pred_check_branch
      %105 = sbr.rel (0) target = $region41
    $region40: #{tpu_custom_call.1} parent=1 // pred_region
      %107 = dma.done [#allocation6], 256
    $region41: #{tpu_custom_call.1} parent=1 // pred_fallthru
      _
    // Predicated region
    $region42: #{tpu_custom_call.1} parent=1 // pred_check
      _
    $region43: #{tpu_custom_call.1} parent=1 // pred_check_branch
      %109 = sbr.rel (0) target = $region45
    $region44: #{tpu_custom_call.1} parent=1 // pred_region
      %111 = dma.done [#allocation6], 256
    $region45: #{tpu_custom_call.1} parent=1 // pred_fallthru
      _
    // Predicated region
    $region46: #{tpu_custom_call.1} parent=1 // pred_check
      _
    $region47: #{tpu_custom_call.1} parent=1 // pred_check_branch
      %113 = sbr.rel (0) target = $region49
    $region48: #{tpu_custom_call.1} parent=1 // pred_region
      %115 = dma.done [#allocation9], 32
    $region49: #{tpu_custom_call.1} parent=1 // pred_fallthru
      _
    // Predicated region
    $region50: #{tpu_custom_call.1} parent=1 // pred_check
      _
    $region51: #{tpu_custom_call.1} parent=1 // pred_check_branch
      %117 = sbr.rel (0) target = $region53
    $region52: #{tpu_custom_call.1} parent=1 // pred_region
      %119 = dma.done [#allocation9], 1536
    $region53: #{tpu_custom_call.1} parent=1 // pred_fallthru
      _
    // Predicated region
    $region54: #{tpu_custom_call.1} parent=1 // pred_check
      _
    $region55: #{tpu_custom_call.1} parent=1 // pred_check_branch
      %121 = sbr.rel (0) target = $region57
    $region56: #{tpu_custom_call.1} parent=1 // pred_region
      %123 = dma.done [#allocation12], 512
    $region57: #{tpu_custom_call.1} parent=1 // pred_fallthru
      _
    %v124 = vld [vmem:[#allocation8] sm:$0x1]
    %s125 = scalar_lea.vmem [#allocation8], 1
    %v126 = vld [vmem:[%s125] sm:$0x1]
    %v127 = vld [vmem:[#allocation2] sm:$0xff]
    %v128 = vld [vmem:[#allocation2 + $0x8] sm:$0xff]
    %vm129 = vcmask 261120
    %v130 = vsel %vm129, %v127, 0.0
    %131 = vadd.xlane.f32.xlu0 %v130
    %v132 = vpop.xlane.xlu0 %131
    %v133 = vsel %vm129, %v128, 0.0
    %134 = vadd.xlane.f32.xlu0 %v133
    %v135 = vpop.xlane.xlu0 %134
    %v136 = vrcp.pop 32.0
    %v137 = vmul.f32 32.0, %v136
    %v138 = vsub.f32 1.0, %v137
    %v139 = vmul.f32 %v136, %v138
    %v140 = vadd.f32 %v136, %v139
    %vm141 = vweird.f32 %v136
    %v142 = vsel %vm141, %v136, %v140
    %v143 = vmul.f32 %v132, %v142
    %v144 = vmul.f32 %v135, %v142
    %v145 = vsub.f32 %v127, %v143
    %v146 = vsub.f32 %v128, %v144
    %v147 = vmul.f32 %v145, %v145
    %v148 = vmul.f32 %v146, %v146
    %v149 = vsel %vm129, %v147, 0.0
    %150 = vadd.xlane.f32.xlu0 %v149
    %v151 = vpop.xlane.xlu0 %150
    %v152 = vsel %vm129, %v148, 0.0
    %153 = vadd.xlane.f32.xlu0 %v152
    %v154 = vpop.xlane.xlu0 %153
    %v155 = vmul.f32 %v151, %v142
    %v156 = vmul.f32 %v154, %v142
    %v157 = vadd.f32 %v155, 1e-05
    %v158 = vadd.f32 %v156, 1e-05
    %v159 = vrsqrt.pop %v157
    %v160 = vmul.f32 %v159, %v157
    %v161 = vmul.f32 %v160, %v159
    %v162 = vmul.f32 0.5, %v161
    %v163 = vsub.f32 1.5, %v162
    %v164 = vmul.f32 %v159, %v163
    %vm165 = vweird.f32 %v157
    %vm166 = vweird.f32 %v159
    %vm167 = vmor %vm165, %vm166
    %v168 = vsel %vm167, %v159, %v164
    %v169 = vrsqrt.pop %v158
    %v170 = vmul.f32 %v169, %v158
    %v171 = vmul.f32 %v170, %v169
    %v172 = vmul.f32 0.5, %v171
    %v173 = vsub.f32 1.5, %v172
    %v174 = vmul.f32 %v169, %v173
    %vm175 = vweird.f32 %v158
    %vm176 = vweird.f32 %v169
    %vm177 = vmor %vm175, %vm176
    %v178 = vsel %vm177, %v169, %v174
    %v179 = vmul.f32 %v145, %v168
    %v180 = vmul.f32 %v146, %v178
    %v182 = vperm.slane %v124, 0
    %v184 = vmul.f32 %v179, %v182
    %v185 = vmul.f32 %v180, %v182
    %v187 = vperm.slane %v126, 0
    %v189 = vadd.f32 %v184, %v187
    %v190 = vadd.f32 %v185, %v187
    %v191 = vld [vmem:[#allocation5] sm:$0xff]
    %v192 = vld [vmem:[#allocation5 + $0x8] sm:$0xff]
    %v193 = vsel %vm129, %v191, 0.0
    %194 = vadd.xlane.f32.xlu0 %v193
    %v195 = vpop.xlane.xlu0 %194
    %v196 = vsel %vm129, %v192, 0.0
    %197 = vadd.xlane.f32.xlu0 %v196
    %v198 = vpop.xlane.xlu0 %197
    %v199 = vmul.f32 %v195, %v142
    %v200 = vmul.f32 %v198, %v142
    %v201 = vsub.f32 %v191, %v199
    %v202 = vsub.f32 %v192, %v200
    %v203 = vmul.f32 %v201, %v201
    %v204 = vmul.f32 %v202, %v202
    %v205 = vsel %vm129, %v203, 0.0
    %206 = vadd.xlane.f32.xlu0 %v205
    %v207 = vpop.xlane.xlu0 %206
    %v208 = vsel %vm129, %v204, 0.0
    %209 = vadd.xlane.f32.xlu0 %v208
    %v210 = vpop.xlane.xlu0 %209
    %v211 = vmul.f32 %v207, %v142
    %v212 = vmul.f32 %v210, %v142
    %v213 = vadd.f32 %v211, 1e-05
    %v214 = vadd.f32 %v212, 1e-05
    %v215 = vrsqrt.pop %v213
    %v216 = vmul.f32 %v215, %v213
    %v217 = vmul.f32 %v216, %v215
    %v218 = vmul.f32 0.5, %v217
    %v219 = vsub.f32 1.5, %v218
    %v220 = vmul.f32 %v215, %v219
    %vm221 = vweird.f32 %v213
    %vm222 = vweird.f32 %v215
    %vm223 = vmor %vm221, %vm222
    %v224 = vsel %vm223, %v215, %v220
    %v225 = vrsqrt.pop %v214
    %v226 = vmul.f32 %v225, %v214
    %v227 = vmul.f32 %v226, %v225
    %v228 = vmul.f32 0.5, %v227
    %v229 = vsub.f32 1.5, %v228
    %v230 = vmul.f32 %v225, %v229
    %vm231 = vweird.f32 %v214
    %vm232 = vweird.f32 %v225
    %vm233 = vmor %vm231, %vm232
    %v234 = vsel %vm233, %v225, %v230
    %v235 = vmul.f32 %v201, %v224
    %v236 = vmul.f32 %v202, %v234
    %v237 = vmul.f32 %v235, %v182
    %v238 = vmul.f32 %v236, %v182
    %v239 = vadd.f32 %v237, %v187
    %v240 = vadd.f32 %v238, %v187
    %v241 = vld [vmem:[#allocation7] sm:$0xff]
    %v242 = vld [vmem:[#allocation7 + $0x8] sm:$0xff]
    %v243 = vsel %vm129, %v241, 0.0
    %244 = vadd.xlane.f32.xlu0 %v243
    %v245 = vpop.xlane.xlu0 %244
    %v246 = vsel %vm129, %v242, 0.0
    %247 = vadd.xlane.f32.xlu0 %v246
    %v248 = vpop.xlane.xlu0 %247
    %v249 = vmul.f32 %v245, %v142
    %v250 = vmul.f32 %v248, %v142
    %v251 = vsub.f32 %v241, %v249
    %v252 = vsub.f32 %v242, %v250
    %v253 = vmul.f32 %v251, %v251
    %v254 = vmul.f32 %v252, %v252
    %v255 = vsel %vm129, %v253, 0.0
    %256 = vadd.xlane.f32.xlu0 %v255
    %v257 = vpop.xlane.xlu0 %256
    %v258 = vsel %vm129, %v254, 0.0
    %259 = vadd.xlane.f32.xlu0 %v258
    %v260 = vpop.xlane.xlu0 %259
    %v261 = vmul.f32 %v257, %v142
    %v262 = vmul.f32 %v260, %v142
    %v263 = vadd.f32 %v261, 1e-05
    %v264 = vadd.f32 %v262, 1e-05
    %v265 = vrsqrt.pop %v263
    %v266 = vmul.f32 %v265, %v263
    %v267 = vmul.f32 %v266, %v265
    %v268 = vmul.f32 0.5, %v267
    %v269 = vsub.f32 1.5, %v268
    %v270 = vmul.f32 %v265, %v269
    %vm271 = vweird.f32 %v263
    %vm272 = vweird.f32 %v265
    %vm273 = vmor %vm271, %vm272
    %v274 = vsel %vm273, %v265, %v270
    %v275 = vrsqrt.pop %v264
    %v276 = vmul.f32 %v275, %v264
    %v277 = vmul.f32 %v276, %v275
    %v278 = vmul.f32 0.5, %v277
    %v279 = vsub.f32 1.5, %v278
    %v280 = vmul.f32 %v275, %v279
    %vm281 = vweird.f32 %v264
    %vm282 = vweird.f32 %v275
    %vm283 = vmor %vm281, %vm282
    %v284 = vsel %vm283, %v275, %v280
    %v285 = vmul.f32 %v251, %v274
    %v286 = vmul.f32 %v252, %v284
    %v287 = vmul.f32 %v285, %v182
    %v288 = vmul.f32 %v286, %v182
    %v289 = vadd.f32 %v287, %v187
    %v290 = vadd.f32 %v288, %v187
    %v291 = vld [vmem:[#allocation10] sm:$0xff]
    %v292 = vld [vmem:[#allocation10 + $0x8] sm:$0xff]
    %v293 = vld [vmem:[#allocation10 + $0x10] sm:$0xff]
    %v294 = vld [vmem:[#allocation10 + $0x18] sm:$0xff]
    %v295 = vld [vmem:[%s5] sm:$0x1]
    %v297 = vperm.slane %v295, 0
    %v300 = vsel %vm129, %v189, 0
    %v303 = vsel %vm129, %v190, 0
    %305 = vmatpush.msra.mxu0 0.0
    %306 = vmatpush.msra.mxu0 0.0
    %307 = vmatpush.msra.mxu0 0.0
    %308 = vmatpush.msra.mxu0 0.0
    %309 = vmatpush.msra.mxu0 0.0
    %310 = vmatpush.msra.mxu0 0.0
    %311 = vmatpush.msra.mxu0 0.0
    %312 = vmatpush.msra.mxu0 0.0
    %313 = vmatpush.msra.mxu0 0.0
    %314 = vmatpush.msra.mxu0 0.0
    %315 = vmatpush.msra.mxu0 0.0
    %316 = vmatpush.msra.mxu0 0.0
    %317 = vmatpush.msra.mxu0 %v294
    %318 = vmatpush.msra.mxu0 %v293
    %319 = vmatpush.msra.mxu0 %v292
    %320 = vmatpush.msra.mxu0 %v291
    %321 = vmatmul.f32.gmra.mxu0 %v300
    %v322 = vpop.f32.mrf.mxu0
    %v323 = vadd.f32 %v297, %v322
    %324 = vmatmul.f32.gmra.mxu0 %v303
    %v325 = vpop.f32.mrf.mxu0
    %v326 = vadd.f32 %v297, %v325
    %327 = vdwg.mxu0
    %v328 = vmul.f32 %v323, 0.35355338
    %v329 = vmul.f32 %v326, 0.35355338
    %s330 = scalar_lea.vmem [#allocation10], 32
    %v331 = vld [vmem:[%s330] sm:$0xff]
    %v332 = vld [vmem:[%s330 + $0x8] sm:$0xff]
    %v333 = vld [vmem:[%s330 + $0x10] sm:$0xff]
    %v334 = vld [vmem:[%s330 + $0x18] sm:$0xff]
    %s335 = scalar_lea.vmem %s5, 1
    %v336 = vld [vmem:[%s335] sm:$0x1]
    %v338 = vperm.slane %v336, 0
    %v341 = vsel %vm129, %v239, 0
    %v344 = vsel %vm129, %v240, 0
    %346 = vmatpush.msra.mxu0 0.0
    %347 = vmatpush.msra.mxu0 0.0
    %348 = vmatpush.msra.mxu0 0.0
    %349 = vmatpush.msra.mxu0 0.0
    %350 = vmatpush.msra.mxu0 0.0
    %351 = vmatpush.msra.mxu0 0.0
    %352 = vmatpush.msra.mxu0 0.0
    %353 = vmatpush.msra.mxu0 0.0
    %354 = vmatpush.msra.mxu0 0.0
    %355 = vmatpush.msra.mxu0 0.0
    %356 = vmatpush.msra.mxu0 0.0
    %357 = vmatpush.msra.mxu0 0.0
    %358 = vmatpush.msra.mxu0 %v334
    %359 = vmatpush.msra.mxu0 %v333
    %360 = vmatpush.msra.mxu0 %v332
    %361 = vmatpush.msra.mxu0 %v331
    %362 = vmatmul.f32.gmra.mxu0 %v341
    %v363 = vpop.f32.mrf.mxu0
    %v364 = vadd.f32 %v338, %v363
    %365 = vmatmul.f32.gmra.mxu0 %v344
    %v366 = vpop.f32.mrf.mxu0
    %v367 = vadd.f32 %v338, %v366
    %368 = vdwg.mxu0
    %s369 = scalar_lea.vmem [#allocation10], 64
    %v370 = vld [vmem:[%s369] sm:$0xff]
    %v371 = vld [vmem:[%s369 + $0x8] sm:$0xff]
    %v372 = vld [vmem:[%s369 + $0x10] sm:$0xff]
    %v373 = vld [vmem:[%s369 + $0x18] sm:$0xff]
    %s374 = scalar_lea.vmem %s5, 2
    %v375 = vld [vmem:[%s374] sm:$0x1]
    %v377 = vperm.slane %v375, 0
    %v380 = vsel %vm129, %v289, 0
    %v383 = vsel %vm129, %v290, 0
    %385 = vmatpush.msra.mxu0 0.0
    %386 = vmatpush.msra.mxu0 0.0
    %387 = vmatpush.msra.mxu0 0.0
    %388 = vmatpush.msra.mxu0 0.0
    %389 = vmatpush.msra.mxu0 0.0
    %390 = vmatpush.msra.mxu0 0.0
    %391 = vmatpush.msra.mxu0 0.0
    %392 = vmatpush.msra.mxu0 0.0
    %393 = vmatpush.msra.mxu0 0.0
    %394 = vmatpush.msra.mxu0 0.0
    %395 = vmatpush.msra.mxu0 0.0
    %396 = vmatpush.msra.mxu0 0.0
    %397 = vmatpush.msra.mxu0 %v373
    %398 = vmatpush.msra.mxu0 %v372
    %399 = vmatpush.msra.mxu0 %v371
    %400 = vmatpush.msra.mxu0 %v370
    %401 = vmatmul.f32.gmra.mxu0 %v380
    %v402 = vpop.f32.mrf.mxu0
    %v403 = vadd.f32 %v377, %v402
    %404 = vmatmul.f32.gmra.mxu0 %v383
    %v405 = vpop.f32.mrf.mxu0
    %v406 = vadd.f32 %v377, %v405
    %407 = vdwg.mxu0
    %v408 = vld [vmem:[%s7] sm:$0x1]
    %v410 = vperm.slane %v408, 0
    %vm412 = vcmask 64512
    %v414 = vsel %vm412, %v328, 0
    %v417 = vsel %vm412, %v364, 0
    %419 = vmatpush.xpose.msra.mxu0 0.0
    %420 = vmatpush.xpose.msra.mxu0 0.0
    %421 = vmatpush.xpose.msra.mxu0 0.0
    %422 = vmatpush.xpose.msra.mxu0 0.0
    %423 = vmatpush.xpose.msra.mxu0 0.0
    %424 = vmatpush.xpose.msra.mxu0 0.0
    %425 = vmatpush.xpose.msra.mxu0 0.0
    %426 = vmatpush.xpose.msra.mxu0 0.0
    %427 = vmatpush.xpose.msra.mxu0 0.0
    %428 = vmatpush.xpose.msra.mxu0 0.0
    %429 = vmatpush.xpose.msra.mxu0 0.0
    %430 = vmatpush.xpose.msra.mxu0 0.0
    %431 = vmatpush.xpose.msra.mxu0 0.0
    %432 = vmatpush.xpose.msra.mxu0 0.0
    %433 = vmatpush.xpose.msra.mxu0 0.0
    %434 = vmatpush.xpose.msra.mxu0 %v417
    %435 = vmatmul.f32.gmra.mxu0 %v414
    %v436 = vpop.f32.mrf.mxu0
    %v437 = vadd.f32 0.0, %v436
    %438 = vdwg.mxu0
    %v439 = vsel %vm412, %v437, -inf
    %440 = vmax.xlane.f32.xlu0 %v439
    %v441 = vpop.xlane.xlu0 %440
    %v442 = vsub.f32 %v437, %v441
    %v443 = vmul.f32 %v442, 1.442695
    %v444 = vpow.pop %v443
    %v445 = vsel %vm412, %v444, 0.0
    %446 = vadd.xlane.f32.xlu0 %v445
    %v447 = vpop.xlane.xlu0 %446
    %v448 = vrcp.pop %v447
    %v450 = vsel %vm412, %v444, 0
    %452 = vmatpush.msra.mxu0 0.0
    %453 = vmatpush.msra.mxu0 0.0
    %454 = vmatpush.msra.mxu0 0.0
    %455 = vmatpush.msra.mxu0 0.0
    %456 = vmatpush.msra.mxu0 0.0
    %457 = vmatpush.msra.mxu0 0.0
    %458 = vmatpush.msra.mxu0 0.0
    %459 = vmatpush.msra.mxu0 0.0
    %460 = vmatpush.msra.mxu0 0.0
    %461 = vmatpush.msra.mxu0 0.0
    %462 = vmatpush.msra.mxu0 0.0
    %463 = vmatpush.msra.mxu0 0.0
    %464 = vmatpush.msra.mxu0 0.0
    %465 = vmatpush.msra.mxu0 0.0
    %466 = vmatpush.msra.mxu0 0.0
    %467 = vmatpush.msra.mxu0 %v403
    %468 = vmatmul.f32.gmra.mxu0 %v450
    %v469 = vpop.f32.mrf.mxu0
    %v470 = vadd.f32 0.0, %v469
    %471 = vdwg.mxu0
    %v472 = vmul.f32 %v470, %v448
    %v473 = vld [vmem:[#allocation11] sm:$0xff]
    %v475 = vsel %vm412, %v472, 0
    %477 = vmatpush.msra.mxu0 0.0
    %478 = vmatpush.msra.mxu0 0.0
    %479 = vmatpush.msra.mxu0 0.0
    %480 = vmatpush.msra.mxu0 0.0
    %481 = vmatpush.msra.mxu0 0.0
    %482 = vmatpush.msra.mxu0 0.0
    %483 = vmatpush.msra.mxu0 0.0
    %484 = vmatpush.msra.mxu0 0.0
    %485 = vmatpush.msra.mxu0 0.0
    %486 = vmatpush.msra.mxu0 0.0
    %487 = vmatpush.msra.mxu0 0.0
    %488 = vmatpush.msra.mxu0 0.0
    %489 = vmatpush.msra.mxu0 0.0
    %490 = vmatpush.msra.mxu0 0.0
    %491 = vmatpush.msra.mxu0 0.0
    %492 = vmatpush.msra.mxu0 %v473
    %493 = vmatmul.f32.gmra.mxu0 %v475
    %v494 = vpop.f32.mrf.mxu0
    %v495 = vadd.f32 0.0, %v494
    %496 = vdwg.mxu0
    %v497 = vadd.f32 %v410, %v495
    %498 = vrot.lane.b32.xlu0 %v328, 120
    %v499 = vpop.permute.xlu0 %498
    %500 = vrot.lane.b32.xlu0 %v364, 120
    %v501 = vpop.permute.xlu0 %500
    %v502 = vsel %vm412, %v499, 0
    %v504 = vsel %vm412, %v501, 0
    %506 = vmatpush.xpose.msra.mxu0 0.0
    %507 = vmatpush.xpose.msra.mxu0 0.0
    %508 = vmatpush.xpose.msra.mxu0 0.0
    %509 = vmatpush.xpose.msra.mxu0 0.0
    %510 = vmatpush.xpose.msra.mxu0 0.0
    %511 = vmatpush.xpose.msra.mxu0 0.0
    %512 = vmatpush.xpose.msra.mxu0 0.0
    %513 = vmatpush.xpose.msra.mxu0 0.0
    %514 = vmatpush.xpose.msra.mxu0 0.0
    %515 = vmatpush.xpose.msra.mxu0 0.0
    %516 = vmatpush.xpose.msra.mxu0 0.0
    %517 = vmatpush.xpose.msra.mxu0 0.0
    %518 = vmatpush.xpose.msra.mxu0 0.0
    %519 = vmatpush.xpose.msra.mxu0 0.0
    %520 = vmatpush.xpose.msra.mxu0 0.0
    %521 = vmatpush.xpose.msra.mxu0 %v504
    %522 = vmatmul.f32.gmra.mxu0 %v502
    %v523 = vpop.f32.mrf.mxu0
    %v524 = vadd.f32 0.0, %v523
    %525 = vdwg.mxu0
    %v526 = vsel %vm412, %v524, -inf
    %527 = vmax.xlane.f32.xlu0 %v526
    %v528 = vpop.xlane.xlu0 %527
    %v529 = vsub.f32 %v524, %v528
    %v530 = vmul.f32 %v529, 1.442695
    %v531 = vpow.pop %v530
    %v532 = vsel %vm412, %v531, 0.0
    %533 = vadd.xlane.f32.xlu0 %v532
    %v534 = vpop.xlane.xlu0 %533
    %v535 = vrcp.pop %v534
    %537 = vrot.lane.b32.xlu0 %v403, 120
    %v538 = vpop.permute.xlu0 %537
    %v541 = vsel %vm412, %v531, 0
    %543 = vmatpush.msra.mxu0 0.0
    %544 = vmatpush.msra.mxu0 0.0
    %545 = vmatpush.msra.mxu0 0.0
    %546 = vmatpush.msra.mxu0 0.0
    %547 = vmatpush.msra.mxu0 0.0
    %548 = vmatpush.msra.mxu0 0.0
    %549 = vmatpush.msra.mxu0 0.0
    %550 = vmatpush.msra.mxu0 0.0
    %551 = vmatpush.msra.mxu0 0.0
    %552 = vmatpush.msra.mxu0 0.0
    %553 = vmatpush.msra.mxu0 0.0
    %554 = vmatpush.msra.mxu0 0.0
    %555 = vmatpush.msra.mxu0 0.0
    %556 = vmatpush.msra.mxu0 0.0
    %557 = vmatpush.msra.mxu0 0.0
    %558 = vmatpush.msra.mxu0 %v538
    %559 = vmatmul.f32.gmra.mxu0 %v541
    %v560 = vpop.f32.mrf.mxu0
    %v561 = vadd.f32 0.0, %v560
    %562 = vdwg.mxu0
    %v563 = vmul.f32 %v561, %v535
    %s564 = scalar_lea.vmem [#allocation11], 8
    %v565 = vld [vmem:[%s564] sm:$0xff]
    %v567 = vsel %vm412, %v563, 0
    %569 = vmatpush.msra.mxu0 0.0
    %570 = vmatpush.msra.mxu0 0.0
    %571 = vmatpush.msra.mxu0 0.0
    %572 = vmatpush.msra.mxu0 0.0
    %573 = vmatpush.msra.mxu0 0.0
    %574 = vmatpush.msra.mxu0 0.0
    %575 = vmatpush.msra.mxu0 0.0
    %576 = vmatpush.msra.mxu0 0.0
    %577 = vmatpush.msra.mxu0 0.0
    %578 = vmatpush.msra.mxu0 0.0
    %579 = vmatpush.msra.mxu0 0.0
    %580 = vmatpush.msra.mxu0 0.0
    %581 = vmatpush.msra.mxu0 0.0
    %582 = vmatpush.msra.mxu0 0.0
    %583 = vmatpush.msra.mxu0 0.0
    %584 = vmatpush.msra.mxu0 %v565
    %585 = vmatmul.f32.gmra.mxu0 %v567
    %v586 = vpop.f32.mrf.mxu0
    %v587 = vadd.f32 0.0, %v586
    %588 = vdwg.mxu0
    %v589 = vadd.f32 %v497, %v587
    %590 = vrot.lane.b32.xlu0 %v328, 112
    %v591 = vpop.permute.xlu0 %590
    %592 = vrot.lane.b32.xlu0 %v364, 112
    %v593 = vpop.permute.xlu0 %592
    %v594 = vsel %vm412, %v591, 0
    %v596 = vsel %vm412, %v593, 0
    %598 = vmatpush.xpose.msra.mxu0 0.0
    %599 = vmatpush.xpose.msra.mxu0 0.0
    %600 = vmatpush.xpose.msra.mxu0 0.0
    %601 = vmatpush.xpose.msra.mxu0 0.0
    %602 = vmatpush.xpose.msra.mxu0 0.0
    %603 = vmatpush.xpose.msra.mxu0 0.0
    %604 = vmatpush.xpose.msra.mxu0 0.0
    %605 = vmatpush.xpose.msra.mxu0 0.0
    %606 = vmatpush.xpose.msra.mxu0 0.0
    %607 = vmatpush.xpose.msra.mxu0 0.0
    %608 = vmatpush.xpose.msra.mxu0 0.0
    %609 = vmatpush.xpose.msra.mxu0 0.0
    %610 = vmatpush.xpose.msra.mxu0 0.0
    %611 = vmatpush.xpose.msra.mxu0 0.0
    %612 = vmatpush.xpose.msra.mxu0 0.0
    %613 = vmatpush.xpose.msra.mxu0 %v596
    %614 = vmatmul.f32.gmra.mxu0 %v594
    %v615 = vpop.f32.mrf.mxu0
    %v616 = vadd.f32 0.0, %v615
    %617 = vdwg.mxu0
    %v618 = vsel %vm412, %v616, -inf
    %619 = vmax.xlane.f32.xlu0 %v618
    %v620 = vpop.xlane.xlu0 %619
    %v621 = vsub.f32 %v616, %v620
    %v622 = vmul.f32 %v621, 1.442695
    %v623 = vpow.pop %v622
    %v624 = vsel %vm412, %v623, 0.0
    %625 = vadd.xlane.f32.xlu0 %v624
    %v626 = vpop.xlane.xlu0 %625
    %v627 = vrcp.pop %v626
    %628 = vrot.lane.b32.xlu0 %v403, 112
    %v629 = vpop.permute.xlu0 %628
    %v632 = vsel %vm412, %v623, 0
    %634 = vmatpush.msra.mxu0 0.0
    %635 = vmatpush.msra.mxu0 0.0
    %636 = vmatpush.msra.mxu0 0.0
    %637 = vmatpush.msra.mxu0 0.0
    %638 = vmatpush.msra.mxu0 0.0
    %639 = vmatpush.msra.mxu0 0.0
    %640 = vmatpush.msra.mxu0 0.0
    %641 = vmatpush.msra.mxu0 0.0
    %642 = vmatpush.msra.mxu0 0.0
    %643 = vmatpush.msra.mxu0 0.0
    %644 = vmatpush.msra.mxu0 0.0
    %645 = vmatpush.msra.mxu0 0.0
    %646 = vmatpush.msra.mxu0 0.0
    %647 = vmatpush.msra.mxu0 0.0
    %648 = vmatpush.msra.mxu0 0.0
    %649 = vmatpush.msra.mxu0 %v629
    %650 = vmatmul.f32.gmra.mxu0 %v632
    %v651 = vpop.f32.mrf.mxu0
    %v652 = vadd.f32 0.0, %v651
    %653 = vdwg.mxu0
    %v654 = vmul.f32 %v652, %v627
    %s655 = scalar_lea.vmem [#allocation11], 16
    %v656 = vld [vmem:[%s655] sm:$0xff]
    %v658 = vsel %vm412, %v654, 0
    %660 = vmatpush.msra.mxu0 0.0
    %661 = vmatpush.msra.mxu0 0.0
    %662 = vmatpush.msra.mxu0 0.0
    %663 = vmatpush.msra.mxu0 0.0
    %664 = vmatpush.msra.mxu0 0.0
    %665 = vmatpush.msra.mxu0 0.0
    %666 = vmatpush.msra.mxu0 0.0
    %667 = vmatpush.msra.mxu0 0.0
    %668 = vmatpush.msra.mxu0 0.0
    %669 = vmatpush.msra.mxu0 0.0
    %670 = vmatpush.msra.mxu0 0.0
    %671 = vmatpush.msra.mxu0 0.0
    %672 = vmatpush.msra.mxu0 0.0
    %673 = vmatpush.msra.mxu0 0.0
    %674 = vmatpush.msra.mxu0 0.0
    %675 = vmatpush.msra.mxu0 %v656
    %676 = vmatmul.f32.gmra.mxu0 %v658
    %v677 = vpop.f32.mrf.mxu0
    %v678 = vadd.f32 0.0, %v677
    %679 = vdwg.mxu0
    %v680 = vadd.f32 %v589, %v678
    %681 = vrot.lane.b32.xlu0 %v328, 104
    %v682 = vpop.permute.xlu0 %681
    %683 = vrot.lane.b32.xlu0 %v364, 104
    %v684 = vpop.permute.xlu0 %683
    %v685 = vsel %vm412, %v682, 0
    %v687 = vsel %vm412, %v684, 0
    %689 = vmatpush.xpose.msra.mxu0 0.0
    %690 = vmatpush.xpose.msra.mxu0 0.0
    %691 = vmatpush.xpose.msra.mxu0 0.0
    %692 = vmatpush.xpose.msra.mxu0 0.0
    %693 = vmatpush.xpose.msra.mxu0 0.0
    %694 = vmatpush.xpose.msra.mxu0 0.0
    %695 = vmatpush.xpose.msra.mxu0 0.0
    %696 = vmatpush.xpose.msra.mxu0 0.0
    %697 = vmatpush.xpose.msra.mxu0 0.0
    %698 = vmatpush.xpose.msra.mxu0 0.0
    %699 = vmatpush.xpose.msra.mxu0 0.0
    %700 = vmatpush.xpose.msra.mxu0 0.0
    %701 = vmatpush.xpose.msra.mxu0 0.0
    %702 = vmatpush.xpose.msra.mxu0 0.0
    %703 = vmatpush.xpose.msra.mxu0 0.0
    %704 = vmatpush.xpose.msra.mxu0 %v687
    %705 = vmatmul.f32.gmra.mxu0 %v685
    %v706 = vpop.f32.mrf.mxu0
    %v707 = vadd.f32 0.0, %v706
    %708 = vdwg.mxu0
    %v709 = vsel %vm412, %v707, -inf
    %710 = vmax.xlane.f32.xlu0 %v709
    %v711 = vpop.xlane.xlu0 %710
    %v712 = vsub.f32 %v707, %v711
    %v713 = vmul.f32 %v712, 1.442695
    %v714 = vpow.pop %v713
    %v715 = vsel %vm412, %v714, 0.0
    %716 = vadd.xlane.f32.xlu0 %v715
    %v717 = vpop.xlane.xlu0 %716
    %v718 = vrcp.pop %v717
    %719 = vrot.lane.b32.xlu0 %v403, 104
    %v720 = vpop.permute.xlu0 %719
    %v723 = vsel %vm412, %v714, 0
    %725 = vmatpush.msra.mxu0 0.0
    %726 = vmatpush.msra.mxu0 0.0
    %727 = vmatpush.msra.mxu0 0.0
    %728 = vmatpush.msra.mxu0 0.0
    %729 = vmatpush.msra.mxu0 0.0
    %730 = vmatpush.msra.mxu0 0.0
    %731 = vmatpush.msra.mxu0 0.0
    %732 = vmatpush.msra.mxu0 0.0
    %733 = vmatpush.msra.mxu0 0.0
    %734 = vmatpush.msra.mxu0 0.0
    %735 = vmatpush.msra.mxu0 0.0
    %736 = vmatpush.msra.mxu0 0.0
    %737 = vmatpush.msra.mxu0 0.0
    %738 = vmatpush.msra.mxu0 0.0
    %739 = vmatpush.msra.mxu0 0.0
    %740 = vmatpush.msra.mxu0 %v720
    %741 = vmatmul.f32.gmra.mxu0 %v723
    %v742 = vpop.f32.mrf.mxu0
    %v743 = vadd.f32 0.0, %v742
    %744 = vdwg.mxu0
    %v745 = vmul.f32 %v743, %v718
    %s746 = scalar_lea.vmem [#allocation11], 24
    %v747 = vld [vmem:[%s746] sm:$0xff]
    %v749 = vsel %vm412, %v745, 0
    %751 = vmatpush.msra.mxu0 0.0
    %752 = vmatpush.msra.mxu0 0.0
    %753 = vmatpush.msra.mxu0 0.0
    %754 = vmatpush.msra.mxu0 0.0
    %755 = vmatpush.msra.mxu0 0.0
    %756 = vmatpush.msra.mxu0 0.0
    %757 = vmatpush.msra.mxu0 0.0
    %758 = vmatpush.msra.mxu0 0.0
    %759 = vmatpush.msra.mxu0 0.0
    %760 = vmatpush.msra.mxu0 0.0
    %761 = vmatpush.msra.mxu0 0.0
    %762 = vmatpush.msra.mxu0 0.0
    %763 = vmatpush.msra.mxu0 0.0
    %764 = vmatpush.msra.mxu0 0.0
    %765 = vmatpush.msra.mxu0 0.0
    %766 = vmatpush.msra.mxu0 %v747
    %767 = vmatmul.f32.gmra.mxu0 %v749
    %v768 = vpop.f32.mrf.mxu0
    %v769 = vadd.f32 0.0, %v768
    %770 = vdwg.mxu0
    %v771 = vadd.f32 %v680, %v769
    %772 = vst.msk [vmem:[#allocation13] sm:$0xff] %vm129, %v771
    %v774 = vsel %vm412, %v329, 0
    %v777 = vsel %vm412, %v367, 0
    %779 = vmatpush.xpose.msra.mxu0 0.0
    %780 = vmatpush.xpose.msra.mxu0 0.0
    %781 = vmatpush.xpose.msra.mxu0 0.0
    %782 = vmatpush.xpose.msra.mxu0 0.0
    %783 = vmatpush.xpose.msra.mxu0 0.0
    %784 = vmatpush.xpose.msra.mxu0 0.0
    %785 = vmatpush.xpose.msra.mxu0 0.0
    %786 = vmatpush.xpose.msra.mxu0 0.0
    %787 = vmatpush.xpose.msra.mxu0 0.0
    %788 = vmatpush.xpose.msra.mxu0 0.0
    %789 = vmatpush.xpose.msra.mxu0 0.0
    %790 = vmatpush.xpose.msra.mxu0 0.0
    %791 = vmatpush.xpose.msra.mxu0 0.0
    %792 = vmatpush.xpose.msra.mxu0 0.0
    %793 = vmatpush.xpose.msra.mxu0 0.0
    %794 = vmatpush.xpose.msra.mxu0 %v777
    %795 = vmatmul.f32.gmra.mxu0 %v774
    %v796 = vpop.f32.mrf.mxu0
    %v797 = vadd.f32 0.0, %v796
    %798 = vdwg.mxu0
    %v799 = vsel %vm412, %v797, -inf
    %800 = vmax.xlane.f32.xlu0 %v799
    %v801 = vpop.xlane.xlu0 %800
    %v802 = vsub.f32 %v797, %v801
    %v803 = vmul.f32 %v802, 1.442695
    %v804 = vpow.pop %v803
    %v805 = vsel %vm412, %v804, 0.0
    %806 = vadd.xlane.f32.xlu0 %v805
    %v807 = vpop.xlane.xlu0 %806
    %v808 = vrcp.pop %v807
    %v810 = vsel %vm412, %v804, 0
    %812 = vmatpush.msra.mxu0 0.0
    %813 = vmatpush.msra.mxu0 0.0
    %814 = vmatpush.msra.mxu0 0.0
    %815 = vmatpush.msra.mxu0 0.0
    %816 = vmatpush.msra.mxu0 0.0
    %817 = vmatpush.msra.mxu0 0.0
    %818 = vmatpush.msra.mxu0 0.0
    %819 = vmatpush.msra.mxu0 0.0
    %820 = vmatpush.msra.mxu0 0.0
    %821 = vmatpush.msra.mxu0 0.0
    %822 = vmatpush.msra.mxu0 0.0
    %823 = vmatpush.msra.mxu0 0.0
    %824 = vmatpush.msra.mxu0 0.0
    %825 = vmatpush.msra.mxu0 0.0
    %826 = vmatpush.msra.mxu0 0.0
    %827 = vmatpush.msra.mxu0 %v406
    %828 = vmatmul.f32.gmra.mxu0 %v810
    %v829 = vpop.f32.mrf.mxu0
    %v830 = vadd.f32 0.0, %v829
    %831 = vdwg.mxu0
    %v832 = vmul.f32 %v830, %v808
    %v833 = vld [vmem:[#allocation11] sm:$0xff]
    %v835 = vsel %vm412, %v832, 0
    %837 = vmatpush.msra.mxu0 0.0
    %838 = vmatpush.msra.mxu0 0.0
    %839 = vmatpush.msra.mxu0 0.0
    %840 = vmatpush.msra.mxu0 0.0
    %841 = vmatpush.msra.mxu0 0.0
    %842 = vmatpush.msra.mxu0 0.0
    %843 = vmatpush.msra.mxu0 0.0
    %844 = vmatpush.msra.mxu0 0.0
    %845 = vmatpush.msra.mxu0 0.0
    %846 = vmatpush.msra.mxu0 0.0
    %847 = vmatpush.msra.mxu0 0.0
    %848 = vmatpush.msra.mxu0 0.0
    %849 = vmatpush.msra.mxu0 0.0
    %850 = vmatpush.msra.mxu0 0.0
    %851 = vmatpush.msra.mxu0 0.0
    %852 = vmatpush.msra.mxu0 %v833
    %853 = vmatmul.f32.gmra.mxu0 %v835
    %v854 = vpop.f32.mrf.mxu0
    %v855 = vadd.f32 0.0, %v854
    %856 = vdwg.mxu0
    %v857 = vadd.f32 %v410, %v855
    %858 = vrot.lane.b32.xlu0 %v329, 120
    %v859 = vpop.permute.xlu0 %858
    %860 = vrot.lane.b32.xlu0 %v367, 120
    %v861 = vpop.permute.xlu0 %860
    %v862 = vsel %vm412, %v859, 0
    %v864 = vsel %vm412, %v861, 0
    %866 = vmatpush.xpose.msra.mxu0 0.0
    %867 = vmatpush.xpose.msra.mxu0 0.0
    %868 = vmatpush.xpose.msra.mxu0 0.0
    %869 = vmatpush.xpose.msra.mxu0 0.0
    %870 = vmatpush.xpose.msra.mxu0 0.0
    %871 = vmatpush.xpose.msra.mxu0 0.0
    %872 = vmatpush.xpose.msra.mxu0 0.0
    %873 = vmatpush.xpose.msra.mxu0 0.0
    %874 = vmatpush.xpose.msra.mxu0 0.0
    %875 = vmatpush.xpose.msra.mxu0 0.0
    %876 = vmatpush.xpose.msra.mxu0 0.0
    %877 = vmatpush.xpose.msra.mxu0 0.0
    %878 = vmatpush.xpose.msra.mxu0 0.0
    %879 = vmatpush.xpose.msra.mxu0 0.0
    %880 = vmatpush.xpose.msra.mxu0 0.0
    %881 = vmatpush.xpose.msra.mxu0 %v864
    %882 = vmatmul.f32.gmra.mxu0 %v862
    %v883 = vpop.f32.mrf.mxu0
    %v884 = vadd.f32 0.0, %v883
    %885 = vdwg.mxu0
    %v886 = vsel %vm412, %v884, -inf
    %887 = vmax.xlane.f32.xlu0 %v886
    %v888 = vpop.xlane.xlu0 %887
    %v889 = vsub.f32 %v884, %v888
    %v890 = vmul.f32 %v889, 1.442695
    %v891 = vpow.pop %v890
    %v892 = vsel %vm412, %v891, 0.0
    %893 = vadd.xlane.f32.xlu0 %v892
    %v894 = vpop.xlane.xlu0 %893
    %v895 = vrcp.pop %v894
    %897 = vrot.lane.b32.xlu0 %v406, 120
    %v898 = vpop.permute.xlu0 %897
    %v901 = vsel %vm412, %v891, 0
    %903 = vmatpush.msra.mxu0 0.0
    %904 = vmatpush.msra.mxu0 0.0
    %905 = vmatpush.msra.mxu0 0.0
    %906 = vmatpush.msra.mxu0 0.0
    %907 = vmatpush.msra.mxu0 0.0
    %908 = vmatpush.msra.mxu0 0.0
    %909 = vmatpush.msra.mxu0 0.0
    %910 = vmatpush.msra.mxu0 0.0
    %911 = vmatpush.msra.mxu0 0.0
    %912 = vmatpush.msra.mxu0 0.0
    %913 = vmatpush.msra.mxu0 0.0
    %914 = vmatpush.msra.mxu0 0.0
    %915 = vmatpush.msra.mxu0 0.0
    %916 = vmatpush.msra.mxu0 0.0
    %917 = vmatpush.msra.mxu0 0.0
    %918 = vmatpush.msra.mxu0 %v898
    %919 = vmatmul.f32.gmra.mxu0 %v901
    %v920 = vpop.f32.mrf.mxu0
    %v921 = vadd.f32 0.0, %v920
    %922 = vdwg.mxu0
    %v923 = vmul.f32 %v921, %v895
    %v924 = vld [vmem:[%s564] sm:$0xff]
    %v926 = vsel %vm412, %v923, 0
    %928 = vmatpush.msra.mxu0 0.0
    %929 = vmatpush.msra.mxu0 0.0
    %930 = vmatpush.msra.mxu0 0.0
    %931 = vmatpush.msra.mxu0 0.0
    %932 = vmatpush.msra.mxu0 0.0
    %933 = vmatpush.msra.mxu0 0.0
    %934 = vmatpush.msra.mxu0 0.0
    %935 = vmatpush.msra.mxu0 0.0
    %936 = vmatpush.msra.mxu0 0.0
    %937 = vmatpush.msra.mxu0 0.0
    %938 = vmatpush.msra.mxu0 0.0
    %939 = vmatpush.msra.mxu0 0.0
    %940 = vmatpush.msra.mxu0 0.0
    %941 = vmatpush.msra.mxu0 0.0
    %942 = vmatpush.msra.mxu0 0.0
    %943 = vmatpush.msra.mxu0 %v924
    %944 = vmatmul.f32.gmra.mxu0 %v926
    %v945 = vpop.f32.mrf.mxu0
    %v946 = vadd.f32 0.0, %v945
    %947 = vdwg.mxu0
    %v948 = vadd.f32 %v857, %v946
    %949 = vrot.lane.b32.xlu0 %v329, 112
    %v950 = vpop.permute.xlu0 %949
    %951 = vrot.lane.b32.xlu0 %v367, 112
    %v952 = vpop.permute.xlu0 %951
    %v953 = vsel %vm412, %v950, 0
    %v955 = vsel %vm412, %v952, 0
    %957 = vmatpush.xpose.msra.mxu0 0.0
    %958 = vmatpush.xpose.msra.mxu0 0.0
    %959 = vmatpush.xpose.msra.mxu0 0.0
    %960 = vmatpush.xpose.msra.mxu0 0.0
    %961 = vmatpush.xpose.msra.mxu0 0.0
    %962 = vmatpush.xpose.msra.mxu0 0.0
    %963 = vmatpush.xpose.msra.mxu0 0.0
    %964 = vmatpush.xpose.msra.mxu0 0.0
    %965 = vmatpush.xpose.msra.mxu0 0.0
    %966 = vmatpush.xpose.msra.mxu0 0.0
    %967 = vmatpush.xpose.msra.mxu0 0.0
    %968 = vmatpush.xpose.msra.mxu0 0.0
    %969 = vmatpush.xpose.msra.mxu0 0.0
    %970 = vmatpush.xpose.msra.mxu0 0.0
    %971 = vmatpush.xpose.msra.mxu0 0.0
    %972 = vmatpush.xpose.msra.mxu0 %v955
    %973 = vmatmul.f32.gmra.mxu0 %v953
    %v974 = vpop.f32.mrf.mxu0
    %v975 = vadd.f32 0.0, %v974
    %976 = vdwg.mxu0
    %v977 = vsel %vm412, %v975, -inf
    %978 = vmax.xlane.f32.xlu0 %v977
    %v979 = vpop.xlane.xlu0 %978
    %v980 = vsub.f32 %v975, %v979
    %v981 = vmul.f32 %v980, 1.442695
    %v982 = vpow.pop %v981
    %v983 = vsel %vm412, %v982, 0.0
    %984 = vadd.xlane.f32.xlu0 %v983
    %v985 = vpop.xlane.xlu0 %984
    %v986 = vrcp.pop %v985
    %987 = vrot.lane.b32.xlu0 %v406, 112
    %v988 = vpop.permute.xlu0 %987
    %v991 = vsel %vm412, %v982, 0
    %993 = vmatpush.msra.mxu0 0.0
    %994 = vmatpush.msra.mxu0 0.0
    %995 = vmatpush.msra.mxu0 0.0
    %996 = vmatpush.msra.mxu0 0.0
    %997 = vmatpush.msra.mxu0 0.0
    %998 = vmatpush.msra.mxu0 0.0
    %999 = vmatpush.msra.mxu0 0.0
    %1000 = vmatpush.msra.mxu0 0.0
    %1001 = vmatpush.msra.mxu0 0.0
    %1002 = vmatpush.msra.mxu0 0.0
    %1003 = vmatpush.msra.mxu0 0.0
    %1004 = vmatpush.msra.mxu0 0.0
    %1005 = vmatpush.msra.mxu0 0.0
    %1006 = vmatpush.msra.mxu0 0.0
    %1007 = vmatpush.msra.mxu0 0.0
    %1008 = vmatpush.msra.mxu0 %v988
    %1009 = vmatmul.f32.gmra.mxu0 %v991
    %v1010 = vpop.f32.mrf.mxu0
    %v1011 = vadd.f32 0.0, %v1010
    %1012 = vdwg.mxu0
    %v1013 = vmul.f32 %v1011, %v986
    %v1014 = vld [vmem:[%s655] sm:$0xff]
    %v1016 = vsel %vm412, %v1013, 0
    %1018 = vmatpush.msra.mxu0 0.0
    %1019 = vmatpush.msra.mxu0 0.0
    %1020 = vmatpush.msra.mxu0 0.0
    %1021 = vmatpush.msra.mxu0 0.0
    %1022 = vmatpush.msra.mxu0 0.0
    %1023 = vmatpush.msra.mxu0 0.0
    %1024 = vmatpush.msra.mxu0 0.0
    %1025 = vmatpush.msra.mxu0 0.0
    %1026 = vmatpush.msra.mxu0 0.0
    %1027 = vmatpush.msra.mxu0 0.0
    %1028 = vmatpush.msra.mxu0 0.0
    %1029 = vmatpush.msra.mxu0 0.0
    %1030 = vmatpush.msra.mxu0 0.0
    %1031 = vmatpush.msra.mxu0 0.0
    %1032 = vmatpush.msra.mxu0 0.0
    %1033 = vmatpush.msra.mxu0 %v1014
    %1034 = vmatmul.f32.gmra.mxu0 %v1016
    %v1035 = vpop.f32.mrf.mxu0
    %v1036 = vadd.f32 0.0, %v1035
    %1037 = vdwg.mxu0
    %v1038 = vadd.f32 %v948, %v1036
    %1039 = vrot.lane.b32.xlu0 %v329, 104
    %v1040 = vpop.permute.xlu0 %1039
    %1041 = vrot.lane.b32.xlu0 %v367, 104
    %v1042 = vpop.permute.xlu0 %1041
    %v1043 = vsel %vm412, %v1040, 0
    %v1045 = vsel %vm412, %v1042, 0
    %1047 = vmatpush.xpose.msra.mxu0 0.0
    %1048 = vmatpush.xpose.msra.mxu0 0.0
    %1049 = vmatpush.xpose.msra.mxu0 0.0
    %1050 = vmatpush.xpose.msra.mxu0 0.0
    %1051 = vmatpush.xpose.msra.mxu0 0.0
    %1052 = vmatpush.xpose.msra.mxu0 0.0
    %1053 = vmatpush.xpose.msra.mxu0 0.0
    %1054 = vmatpush.xpose.msra.mxu0 0.0
    %1055 = vmatpush.xpose.msra.mxu0 0.0
    %1056 = vmatpush.xpose.msra.mxu0 0.0
    %1057 = vmatpush.xpose.msra.mxu0 0.0
    %1058 = vmatpush.xpose.msra.mxu0 0.0
    %1059 = vmatpush.xpose.msra.mxu0 0.0
    %1060 = vmatpush.xpose.msra.mxu0 0.0
    %1061 = vmatpush.xpose.msra.mxu0 0.0
    %1062 = vmatpush.xpose.msra.mxu0 %v1045
    %1063 = vmatmul.f32.gmra.mxu0 %v1043
    %v1064 = vpop.f32.mrf.mxu0
    %v1065 = vadd.f32 0.0, %v1064
    %1066 = vdwg.mxu0
    %v1067 = vsel %vm412, %v1065, -inf
    %1068 = vmax.xlane.f32.xlu0 %v1067
    %v1069 = vpop.xlane.xlu0 %1068
    %v1070 = vsub.f32 %v1065, %v1069
    %v1071 = vmul.f32 %v1070, 1.442695
    %v1072 = vpow.pop %v1071
    %v1073 = vsel %vm412, %v1072, 0.0
    %1074 = vadd.xlane.f32.xlu0 %v1073
    %v1075 = vpop.xlane.xlu0 %1074
    %v1076 = vrcp.pop %v1075
    %1077 = vrot.lane.b32.xlu0 %v406, 104
    %v1078 = vpop.permute.xlu0 %1077
    %v1081 = vsel %vm412, %v1072, 0
    %1083 = vmatpush.msra.mxu0 0.0
    %1084 = vmatpush.msra.mxu0 0.0
    %1085 = vmatpush.msra.mxu0 0.0
    %1086 = vmatpush.msra.mxu0 0.0
    %1087 = vmatpush.msra.mxu0 0.0
    %1088 = vmatpush.msra.mxu0 0.0
    %1089 = vmatpush.msra.mxu0 0.0
    %1090 = vmatpush.msra.mxu0 0.0
    %1091 = vmatpush.msra.mxu0 0.0
    %1092 = vmatpush.msra.mxu0 0.0
    %1093 = vmatpush.msra.mxu0 0.0
    %1094 = vmatpush.msra.mxu0 0.0
    %1095 = vmatpush.msra.mxu0 0.0
    %1096 = vmatpush.msra.mxu0 0.0
    %1097 = vmatpush.msra.mxu0 0.0
    %1098 = vmatpush.msra.mxu0 %v1078
    %1099 = vmatmul.f32.gmra.mxu0 %v1081
    %v1100 = vpop.f32.mrf.mxu0
    %v1101 = vadd.f32 0.0, %v1100
    %1102 = vdwg.mxu0
    %v1103 = vmul.f32 %v1101, %v1076
    %v1104 = vld [vmem:[%s746] sm:$0xff]
    %v1106 = vsel %vm412, %v1103, 0
    %1108 = vmatpush.msra.mxu0 0.0
    %1109 = vmatpush.msra.mxu0 0.0
    %1110 = vmatpush.msra.mxu0 0.0
    %1111 = vmatpush.msra.mxu0 0.0
    %1112 = vmatpush.msra.mxu0 0.0
    %1113 = vmatpush.msra.mxu0 0.0
    %1114 = vmatpush.msra.mxu0 0.0
    %1115 = vmatpush.msra.mxu0 0.0
    %1116 = vmatpush.msra.mxu0 0.0
    %1117 = vmatpush.msra.mxu0 0.0
    %1118 = vmatpush.msra.mxu0 0.0
    %1119 = vmatpush.msra.mxu0 0.0
    %1120 = vmatpush.msra.mxu0 0.0
    %1121 = vmatpush.msra.mxu0 0.0
    %1122 = vmatpush.msra.mxu0 0.0
    %1123 = vmatpush.msra.mxu0 %v1104
    %1124 = vmatmul.f32.gmra.mxu0 %v1106
    %v1125 = vpop.f32.mrf.mxu0
    %v1126 = vadd.f32 0.0, %v1125
    %1127 = vdwg.mxu0
    %v1128 = vadd.f32 %v1038, %v1126
    %1129 = vst.msk [vmem:[#allocation13 + $0x8] sm:$0xff] %vm129, %v1128
    // Predicated region
    $region58: #{tpu_custom_call.1} parent=1 // pred_check
      _
    $region59: #{tpu_custom_call.1} parent=1 // pred_check_branch
      %1131 = sbr.rel (0) target = $region61
    $region60: #{tpu_custom_call.1} parent=1 // pred_region
      %1133 = vsyncadd [#allocation4], 0
      %s1134 = sshll.u32 [#allocation13], 4
      %s1135 = int_to_ptr.vmem [resolvable:$true] %s1134
      %s1136 = sshll.u32 %s8, 4
      %s1137 = int_to_ptr.hbm [resolvable:$true] %s1136
      %1142 = dma.vmem_to_hbm [thread:$0]  %s1135, 256, %s1137, [#allocation4], 128, 128, 8
    $region61: #{tpu_custom_call.1} parent=1 // pred_fallthru
      _
    // Predicated region
    $region62: #{tpu_custom_call.1} parent=1 // pred_check
      _
    $region63: #{tpu_custom_call.1} parent=1 // pred_check_branch
      %1144 = sbr.rel (0) target = $region65
    $region64: #{tpu_custom_call.1} parent=1 // pred_region
      %1146 = dma.done [#allocation4], 256
    $region65: #{tpu_custom_call.1} parent=1 // pred_fallthru
      _
    %1147 = vsyncpa [#allocation3], 1
    %1148 = vsyncpa [#allocation6], 1
    %1149 = vsyncpa [#allocation9], 1
    %1150 = vsyncpa [#allocation12], 1
    %1151 = vsyncpa [#allocation4], 1

</llo_original>
